<compile_context>
chip_gen: v5e
topology: v5e:2x2
jax: 0.10.0
libtpu: 0.0.40
codegen_flags: <defaults>
</compile_context>

<pallas_src>
import math

import jax
import jax.numpy as jnp
from jax.experimental import pallas as pl
from jax.experimental.pallas import tpu as pltpu


def time_embedding_kernel(x_ref, w1_ref, b1_ref, w2_ref, b2_ref, o_ref, h_ref):
    """Grid = (batch tile i, w2 column tile n). h_ref: (tm, H) f32 VMEM scratch."""
    # The hidden activation depends only on the batch tile: compute it once per
    # batch tile (first N step) into explicit f32 VMEM scratch, then reuse it
    # for every w2 column tile.  Keeps vreg pressure bounded at large tm.
    @pl.when(pl.program_id(1) == 0)
    def _():
        h = jnp.dot(x_ref[...], w1_ref[...], preferred_element_type=jnp.float32)
        h = h + b1_ref[...]
        # SiLU: h * sigmoid(h). exp + approx reciprocal both run on the EUP.
        h_ref[...] = h * pl.reciprocal(1.0 + jnp.exp(-h), approx=True)

    # Linear 2 on the current w2 column tile; cast the activation to the weight
    # dtype so bf16 weights get a bf16 x bf16 MXU issue; accumulate in f32.
    act = h_ref[...].astype(w2_ref.dtype)
    out = jnp.dot(act, w2_ref[...], preferred_element_type=jnp.float32)
    o_ref[...] = (out + b2_ref[...]).astype(o_ref.dtype)


def _tpu_vmem_info():
    """Returns (per-core VMEM capacity bytes, is_v7x); conservative if unknown."""
    try:
        kind = jax.devices()[0].device_kind.lower()
    except Exception:
        kind = ""
    is_v7 = ("v7" in kind) or ("tpu7" in kind)
    return (64 * 1024 * 1024 if is_v7 else 128 * 1024 * 1024), is_v7


def time_embedding(x, w1, b1, w2, b2, *, block_m=512, force_tn=None):
    """x: [B, E]; w1: [E, H]; b1: [H]; w2: [H, H]; b2: [H] -> [B, H]."""
    B, E = x.shape
    H = w1.shape[1]
    assert w1.shape == (E, H)
    assert w2.shape == (H, H)
    assert b1.shape == (H,) and b2.shape == (H,)

    # Biases kept 2-D (1, H) and f32 so the bias add / SiLU happen in f32.
    b1_2d = b1.reshape(1, H).astype(jnp.float32)
    b2_2d = b2.reshape(1, H).astype(jnp.float32)

    out_dtype = x.dtype
    x_iz = jnp.dtype(x.dtype).itemsize
    w_iz = jnp.dtype(w1.dtype).itemsize
    o_iz = jnp.dtype(out_dtype).itemsize

    vmem_cap, is_v7 = _tpu_vmem_info()
    budget_cap = (3 * vmem_cap) // 4  # leave headroom for compiler scratch/spill

    # ---------------- batch tile ----------------
    if B > block_m:
        tm = block_m
    else:
        tm = B
        if is_v7 and B >= 16:
            # Split the batch so both v7x TensorCores get at least one step.
            half = (((B + 1) // 2) + 7) // 8 * 8  # cdiv(B,2) rounded to sublane 8
            if half < B:
                tm = half

    # Exact per-buffer VMEM accounting (no double inflation).
    def budget(tm_, tn_, w2_nbuf):
        return (2 * tm_ * E * x_iz                      # x tile, double-buffered
                + 2 * tm_ * tn_ * o_iz                  # out tile, double-buffered
                + E * H * w_iz + H * 4                  # w1 + b1, single-buffered
                + w2_nbuf * (H * tn_ * w_iz + tn_ * 4)  # w2 + b2 tiles
                + tm_ * H * 4)                          # f32 hidden scratch

    # ---------------- w2 column tile ----------------
    full_w_bytes = (E * H + H * H) * w_iz + 2 * H * 4
    if force_tn is not None:
        tn = min(int(force_tn), H)
        w2_nbuf = 1 if tn == H else 2
    elif full_w_bytes <= vmem_cap // 2 and budget(tm, H, 1) <= budget_cap:
        tn, w2_nbuf = H, 1                               # w2 fully VMEM-resident
    else:
        # Diffusion-scale H: column-tile w2 (tn multiple of 256) so it fits
        # v7x's 64 MiB per-core VMEM; batch axis stays outermost.
        w2_nbuf = 2
        tn = next((c for c in (2048, 1024, 512, 256)
                   if c <= H and budget(tm, c, 2) <= budget_cap), None)
        if tn is None:
            tn = 256 if H >= 256 else H
            while tm > 256 and budget(tm, tn, 2) > budget_cap:
                tm = max(256, tm // 2)

    grid = (pl.cdiv(B, tm), pl.cdiv(H, tn))

    needed = budget(tm, tn, w2_nbuf)
    vmem_limit = min(budget_cap, max(16 * 1024 * 1024, int(needed * 1.15)))

    cost = pl.CostEstimate(
        flops=2 * B * H * (E + H),
        transcendentals=2 * B * H,  # exp + approx reciprocal per hidden activation
        bytes_accessed=int(x.size * x_iz + w1.size * w_iz + w2.size * w_iz
                           + b1_2d.size * 4 + b2_2d.size * 4 + B * H * o_iz),
    )

    def build(single_buffer_consts, dim_semantics):
        def const_spec(shape, index_map):
            if single_buffer_consts:
                return pl.BlockSpec(shape, index_map, pipeline_mode=pl.Buffered(1))
            return pl.BlockSpec(shape, index_map)

        if w2_nbuf == 1:   # constant block -> single-buffer it too
            w2_spec = const_spec((H, tn), lambda i, n: (0, n))
            b2_spec = const_spec((1, tn), lambda i, n: (0, n))
        else:              # moving column tiles -> keep default double-buffering
            w2_spec = pl.BlockSpec((H, tn), lambda i, n: (0, n))
            b2_spec = pl.BlockSpec((1, tn), lambda i, n: (0, n))

        return pl.pallas_call(
            time_embedding_kernel,
            out_shape=jax.ShapeDtypeStruct((B, H), out_dtype),
            grid_spec=pltpu.PrefetchScalarGridSpec(
                num_scalar_prefetch=0,
                grid=grid,
                in_specs=[
                    pl.BlockSpec((tm, E), lambda i, n: (i, 0)),  # x: batch tiled
                    const_spec((E, H), lambda i, n: (0, 0)),     # w1: resident
                    const_spec((1, H), lambda i, n: (0, 0)),     # b1: resident
                    w2_spec,                                     # w2
                    b2_spec,                                     # b2
                ],
                out_specs=pl.BlockSpec((tm, tn), lambda i, n: (i, n)),
                scratch_shapes=[pltpu.VMEM((tm, H), jnp.float32)],
            ),
            compiler_params=pltpu.CompilerParams(
                dimension_semantics=dim_semantics,
                vmem_limit_bytes=vmem_limit,
            ),
            cost_estimate=cost,
        )

    args = (x, w1, b1_2d, w2, b2_2d)
    tuned_sem = ((pltpu.CORE_PARALLEL if is_v7 else pltpu.PARALLEL),
                 pltpu.ARBITRARY)
    try:
        return build(True, tuned_sem)(*args)
    except Exception:
        # Graceful degradation if pl.Buffered(1) / CORE_PARALLEL are rejected by
        # the installed jax/libtpu: fall back to the known-good conservative
        # configuration (default double-buffering, plain "parallel" semantics).
        return build(False, ("parallel", "arbitrary"))(*args)


def init_params(key, n_embd):
    """Deterministic init mimicking nn.Linear default (U(-1/sqrt(fan_in), ..))."""
    h = 4 * n_embd
    k1, k2, k3, k4 = jax.random.split(key, 4)

    bound1 = 1.0 / math.sqrt(n_embd)
    w1 = jax.random.uniform(k1, (n_embd, h), jnp.float32, -bound1, bound1)
    b1 = jax.random.uniform(k2, (h,), jnp.float32, -bound1, bound1)

    bound2 = 1.0 / math.sqrt(h)
    w2 = jax.random.uniform(k3, (h, h), jnp.float32, -bound2, bound2)
    b2 = jax.random.uniform(k4, (h,), jnp.float32, -bound2, bound2)

    return w1, b1, w2, b2


def reference(x, w1, b1, w2, b2):
    h = x @ w1 + b1
    h = h * jax.nn.sigmoid(h)
    return h @ w2 + b2


if __name__ == "__main__":
    key = jax.random.PRNGKey(0)
    k_x, k_p, k_x2, k_p2 = jax.random.split(key, 4)

    # -- Case 1: f32, w2 fully VMEM-resident; single- and multi-tile grids --
    batch, n_embd = 256, 32
    H = 4 * n_embd
    x = jax.random.normal(k_x, (batch, n_embd), jnp.float32)
    w1, b1, w2, b2 = init_params(k_p, n_embd)
    ref = reference(x, w1, b1, w2, b2)

    out = jax.block_until_ready(time_embedding(x, w1, b1, w2, b2))
    assert out.shape == (batch, H)
    assert jnp.allclose(out, ref, atol=5e-3, rtol=5e-3), "f32 mismatch vs reference"

    # Force two batch tiles: exercises the grid pipeline + weight residency.
    out2t = jax.block_until_ready(time_embedding(x, w1, b1, w2, b2, block_m=128))
    assert jnp.allclose(out2t, ref, atol=5e-3, rtol=5e-3), "tiled f32 mismatch"

    # -- Case 2: bf16 operands with f32 accumulation --
    out_bf = jax.block_until_ready(time_embedding(
        x.astype(jnp.bfloat16), w1.astype(jnp.bfloat16), b1,
        w2.astype(jnp.bfloat16), b2))
    assert out_bf.shape == (batch, H)
    assert jnp.allclose(out_bf.astype(jnp.float32), ref, atol=5e-2, rtol=5e-2), (
        "bf16 mismatch vs reference")

    # -- Case 3: forced w2 column tiling (small-scale proxy for the large-H /
    #    v7x path: N grid axis + hidden-scratch reuse across column tiles) --
    batch2, n_embd2 = 64, 64
    x2 = jax.random.normal(k_x2, (batch2, n_embd2), jnp.float32)
    p2 = init_params(k_p2, n_embd2)
    ref2 = reference(x2, *p2)
    out_ct = jax.block_until_ready(time_embedding(x2, *p2, force_tn=128))
    assert out_ct.shape == (batch2, 4 * n_embd2)
    assert jnp.allclose(out_ct, ref2, atol=1e-2, rtol=1e-2), "column-tiled mismatch"

    print("KERNEL_OK")
</pallas_src>

<mosaic_0001>
module attributes {stable_mosaic.version = 11 : i64} {
  func.func @time_embedding_kernel(%arg0: i32, %arg1: i32, %arg2: memref<256x32xf32, #tpu.memory_space<vmem>>, %arg3: memref<32x128xf32, #tpu.memory_space<vmem>>, %arg4: memref<1x128xf32, #tpu.memory_space<vmem>>, %arg5: memref<128x128xf32, #tpu.memory_space<vmem>>, %arg6: memref<1x128xf32, #tpu.memory_space<vmem>>, %arg7: memref<256x128xf32, #tpu.memory_space<vmem>>, %arg8: memref<256x128xf32, #tpu.memory_space<vmem>>) attributes {dimension_semantics = [#tpu.dimension_semantics<parallel>, #tpu.dimension_semantics<arbitrary>], iteration_bounds = array<i64: 1, 1>, scalar_prefetch = 0 : i64, scratch_operands = 1 : i64, tpu.core_type = #tpu.core_type<tc>, window_params = [{transform_indices = @transform_0, window_bounds = array<i64: 256, 32>}, {pipeline_mode = #tpu.pipeline_mode<synchronous>, transform_indices = @transform_1, window_bounds = array<i64: 32, 128>}, {pipeline_mode = #tpu.pipeline_mode<synchronous>, transform_indices = @transform_2, window_bounds = array<i64: 1, 128>}, {pipeline_mode = #tpu.pipeline_mode<synchronous>, transform_indices = @transform_3, window_bounds = array<i64: 128, 128>}, {pipeline_mode = #tpu.pipeline_mode<synchronous>, transform_indices = @transform_4, window_bounds = array<i64: 1, 128>}, {transform_indices = @transform_5, window_bounds = array<i64: 256, 128>}]} {
    %c0_i32 = arith.constant 0 : i32
    %0 = arith.cmpi eq, %arg1, %c0_i32 : i32
    %1 = arith.extui %0 : i1 to i32
    %c0_i32_0 = arith.constant 0 : i32
    %2 = arith.cmpi ne, %1, %c0_i32_0 : i32
    scf.if %2 {
      %c0_8 = arith.constant 0 : index
      %c0_9 = arith.constant 0 : index
      %10 = vector.load %arg2[%c0_8, %c0_9] : memref<256x32xf32, #tpu.memory_space<vmem>>, vector<256x32xf32>
      %c0_10 = arith.constant 0 : index
      %c0_11 = arith.constant 0 : index
      %11 = vector.load %arg3[%c0_10, %c0_11] : memref<32x128xf32, #tpu.memory_space<vmem>>, vector<32x128xf32>
      %cst_12 = arith.constant dense<0.000000e+00> : vector<256x128xf32>
      %12 = tpu.matmul %10, %11, %cst_12 {dimension_numbers = #tpu.dot_dimension_numbers<[1], [0], [0], [1], [0, 0, 1, 1], [], []>} : vector<256x32xf32>, vector<32x128xf32>, vector<256x128xf32> -> vector<256x128xf32>
      %c0_13 = arith.constant 0 : index
      %c0_14 = arith.constant 0 : index
      %13 = vector.load %arg4[%c0_13, %c0_14] : memref<1x128xf32, #tpu.memory_space<vmem>>, vector<1x128xf32>
      %14 = vector.broadcast %13 : vector<1x128xf32> to vector<256x128xf32>
      %15 = arith.addf %12, %14 : vector<256x128xf32>
      %cst_15 = arith.constant 0.000000e+00 : f32
      %16 = vector.broadcast %cst_15 : f32 to vector<256x128xf32>
      %17 = arith.subf %16, %15 : vector<256x128xf32>
      %18 = math.exp %17 : vector<256x128xf32>
      %cst_16 = arith.constant 1.000000e+00 : f32
      %19 = vector.broadcast %cst_16 : f32 to vector<256x128xf32>
      %20 = arith.addf %19, %18 : vector<256x128xf32>
      %21 = tpu.reciprocal %20 {approx = true} : vector<256x128xf32> -> vector<256x128xf32>
      %22 = arith.mulf %15, %21 : vector<256x128xf32>
      %c0_17 = arith.constant 0 : index
      %c0_18 = arith.constant 0 : index
      %23 = vector.load %arg8[%c0_17, %c0_18] : memref<256x128xf32, #tpu.memory_space<vmem>>, vector<256x128xf32>
      tpu.vector_store %arg8[%c0_17, %c0_18], %22 {strides = array<i32>} : memref<256x128xf32, #tpu.memory_space<vmem>>, vector<256x128xf32>,
    } else {
    }
    %c0 = arith.constant 0 : index
    %c0_1 = arith.constant 0 : index
    %3 = vector.load %arg8[%c0, %c0_1] : memref<256x128xf32, #tpu.memory_space<vmem>>, vector<256x128xf32>
    %c0_2 = arith.constant 0 : index
    %c0_3 = arith.constant 0 : index
    %4 = vector.load %arg5[%c0_2, %c0_3] : memref<128x128xf32, #tpu.memory_space<vmem>>, vector<128x128xf32>
    %cst = arith.constant dense<0.000000e+00> : vector<256x128xf32>
    %5 = tpu.matmul %3, %4, %cst {dimension_numbers = #tpu.dot_dimension_numbers<[1], [0], [0], [1], [0, 0, 1, 1], [], []>} : vector<256x128xf32>, vector<128x128xf32>, vector<256x128xf32> -> vector<256x128xf32>
    %c0_4 = arith.constant 0 : index
    %c0_5 = arith.constant 0 : index
    %6 = vector.load %arg6[%c0_4, %c0_5] : memref<1x128xf32, #tpu.memory_space<vmem>>, vector<1x128xf32>
    %7 = vector.broadcast %6 : vector<1x128xf32> to vector<256x128xf32>
    %8 = arith.addf %5, %7 : vector<256x128xf32>
    %c0_6 = arith.constant 0 : index
    %c0_7 = arith.constant 0 : index
    %9 = vector.load %arg7[%c0_6, %c0_7] : memref<256x128xf32, #tpu.memory_space<vmem>>, vector<256x128xf32>
    tpu.vector_store %arg7[%c0_6, %c0_7], %8 {strides = array<i32>} : memref<256x128xf32, #tpu.memory_space<vmem>>, vector<256x128xf32>,
    return
  }
  func.func @transform_0(%arg0: i32, %arg1: i32) -> (i32, i32) {
    %c0_i32 = arith.constant 0 : i32
    %c0_i32_0 = arith.constant 0 : i32
    return %arg0, %c0_i32 : i32, i32
  }
  func.func @transform_1(%arg0: i32, %arg1: i32) -> (i32, i32) {
    %c0_i32 = arith.constant 0 : i32
    %c0_i32_0 = arith.constant 0 : i32
    %c0_i32_1 = arith.constant 0 : i32
    return %c0_i32, %c0_i32_0 : i32, i32
  }
  func.func @transform_2(%arg0: i32, %arg1: i32) -> (i32, i32) {
    %c0_i32 = arith.constant 0 : i32
    %c0_i32_0 = arith.constant 0 : i32
    %c0_i32_1 = arith.constant 0 : i32
    return %c0_i32, %c0_i32_0 : i32, i32
  }
  func.func @transform_3(%arg0: i32, %arg1: i32) -> (i32, i32) {
    %c0_i32 = arith.constant 0 : i32
    %c0_i32_0 = arith.constant 0 : i32
    return %c0_i32, %arg1 : i32, i32
  }
  func.func @transform_4(%arg0: i32, %arg1: i32) -> (i32, i32) {
    %c0_i32 = arith.constant 0 : i32
    %c0_i32_0 = arith.constant 0 : i32
    return %c0_i32, %arg1 : i32, i32
  }
  func.func @transform_5(%arg0: i32, %arg1: i32) -> (i32, i32) {
    %c0_i32 = arith.constant 0 : i32
    return %arg0, %arg1 : i32, i32
  }
}

module attributes {stable_mosaic.version = 11 : i64} {
  func.func @time_embedding_kernel(%arg0: i32, %arg1: i32, %arg2: memref<256x32xf32, #tpu.memory_space<vmem>>, %arg3: memref<32x128xf32, #tpu.memory_space<vmem>>, %arg4: memref<1x128xf32, #tpu.memory_space<vmem>>, %arg5: memref<128x128xf32, #tpu.memory_space<vmem>>, %arg6: memref<1x128xf32, #tpu.memory_space<vmem>>, %arg7: memref<256x128xf32, #tpu.memory_space<vmem>>, %arg8: memref<256x128xf32, #tpu.memory_space<vmem>>) attributes {dimension_semantics = [#tpu.dimension_semantics<parallel>, #tpu.dimension_semantics<arbitrary>], iteration_bounds = array<i64: 1, 1>, scalar_prefetch = 0 : i64, scratch_operands = 1 : i64, tpu.core_type = #tpu.core_type<tc>, window_params = [{transform_indices = @transform_0, window_bounds = array<i64: 256, 32>}, {pipeline_mode = #tpu.pipeline_mode<synchronous>, transform_indices = @transform_1, window_bounds = array<i64: 32, 128>}, {pipeline_mode = #tpu.pipeline_mode<synchronous>, transform_indices = @transform_2, window_bounds = array<i64: 1, 128>}, {transform_indices = @transform_3, window_bounds = array<i64: 128, 128>}, {transform_indices = @transform_4, window_bounds = array<i64: 1, 128>}, {transform_indices = @transform_5, window_bounds = array<i64: 256, 128>}]} {
    %c0_i32 = arith.constant 0 : i32
    %0 = arith.cmpi eq, %arg1, %c0_i32 : i32
    %1 = arith.extui %0 : i1 to i32
    %c0_i32_0 = arith.constant 0 : i32
    %2 = arith.cmpi ne, %1, %c0_i32_0 : i32
    scf.if %2 {
      %c0_8 = arith.constant 0 : index
      %c0_9 = arith.constant 0 : index
      %10 = vector.load %arg2[%c0_8, %c0_9] : memref<256x32xf32, #tpu.memory_space<vmem>>, vector<256x32xf32>
      %c0_10 = arith.constant 0 : index
      %c0_11 = arith.constant 0 : index
      %11 = vector.load %arg3[%c0_10, %c0_11] : memref<32x128xf32, #tpu.memory_space<vmem>>, vector<32x128xf32>
      %cst_12 = arith.constant dense<0.000000e+00> : vector<256x128xf32>
      %12 = tpu.matmul %10, %11, %cst_12 {dimension_numbers = #tpu.dot_dimension_numbers<[1], [0], [0], [1], [0, 0, 1, 1], [], []>} : vector<256x32xf32>, vector<32x128xf32>, vector<256x128xf32> -> vector<256x128xf32>
      %c0_13 = arith.constant 0 : index
      %c0_14 = arith.constant 0 : index
      %13 = vector.load %arg4[%c0_13, %c0_14] : memref<1x128xf32, #tpu.memory_space<vmem>>, vector<1x128xf32>
      %14 = vector.broadcast %13 : vector<1x128xf32> to vector<256x128xf32>
      %15 = arith.addf %12, %14 : vector<256x128xf32>
      %cst_15 = arith.constant 0.000000e+00 : f32
      %16 = vector.broadcast %cst_15 : f32 to vector<256x128xf32>
      %17 = arith.subf %16, %15 : vector<256x128xf32>
      %18 = math.exp %17 : vector<256x128xf32>
      %cst_16 = arith.constant 1.000000e+00 : f32
      %19 = vector.broadcast %cst_16 : f32 to vector<256x128xf32>
      %20 = arith.addf %19, %18 : vector<256x128xf32>
      %21 = tpu.reciprocal %20 {approx = true} : vector<256x128xf32> -> vector<256x128xf32>
      %22 = arith.mulf %15, %21 : vector<256x128xf32>
      %c0_17 = arith.constant 0 : index
      %c0_18 = arith.constant 0 : index
      %23 = vector.load %arg8[%c0_17, %c0_18] : memref<256x128xf32, #tpu.memory_space<vmem>>, vector<256x128xf32>
      tpu.vector_store %arg8[%c0_17, %c0_18], %22 {strides = array<i32>} : memref<256x128xf32, #tpu.memory_space<vmem>>, vector<256x128xf32>,
    } else {
    }
    %c0 = arith.constant 0 : index
    %c0_1 = arith.constant 0 : index
    %3 = vector.load %arg8[%c0, %c0_1] : memref<256x128xf32, #tpu.memory_space<vmem>>, vector<256x128xf32>
    %c0_2 = arith.constant 0 : index
    %c0_3 = arith.constant 0 : index
    %4 = vector.load %arg5[%c0_2, %c0_3] : memref<128x128xf32, #tpu.memory_space<vmem>>, vector<128x128xf32>
    %cst = arith.constant dense<0.000000e+00> : vector<256x128xf32>
    %5 = tpu.matmul %3, %4, %cst {dimension_numbers = #tpu.dot_dimension_numbers<[1], [0], [0], [1], [0, 0, 1, 1], [], []>} : vector<256x128xf32>, vector<128x128xf32>, vector<256x128xf32> -> vector<256x128xf32>
    %c0_4 = arith.constant 0 : index
    %c0_5 = arith.constant 0 : index
    %6 = vector.load %arg6[%c0_4, %c0_5] : memref<1x128xf32, #tpu.memory_space<vmem>>, vector<1x128xf32>
    %7 = vector.broadcast %6 : vector<1x128xf32> to vector<256x128xf32>
    %8 = arith.addf %5, %7 : vector<256x128xf32>
    %c0_6 = arith.constant 0 : index
    %c0_7 = arith.constant 0 : index
    %9 = vector.load %arg7[%c0_6, %c0_7] : memref<256x128xf32, #tpu.memory_space<vmem>>, vector<256x128xf32>
    tpu.vector_store %arg7[%c0_6, %c0_7], %8 {strides = array<i32>} : memref<256x128xf32, #tpu.memory_space<vmem>>, vector<256x128xf32>,
    return
  }
  func.func @transform_0(%arg0: i32, %arg1: i32) -> (i32, i32) {
    %c0_i32 = arith.constant 0 : i32
    %c0_i32_0 = arith.constant 0 : i32
    return %arg0, %c0_i32 : i32, i32
  }
  func.func @transform_1(%arg0: i32, %arg1: i32) -> (i32, i32) {
    %c0_i32 = arith.constant 0 : i32
    %c0_i32_0 = arith.constant 0 : i32
    %c0_i32_1 = arith.constant 0 : i32
    return %c0_i32, %c0_i32_0 : i32, i32
  }
  func.func @transform_2(%arg0: i32, %arg1: i32) -> (i32, i32) {
    %c0_i32 = arith.constant 0 : i32
    %c0_i32_0 = arith.constant 0 : i32
    %c0_i32_1 = arith.constant 0 : i32
    return %c0_i32, %c0_i32_0 : i32, i32
  }
  func.func @transform_3(%arg0: i32, %arg1: i32) -> (i32, i32) {
    %c0_i32 = arith.constant 0 : i32
    %c0_i32_0 = arith.constant 0 : i32
    return %c0_i32, %arg1 : i32, i32
  }
  func.func @transform_4(%arg0: i32, %arg1: i32) -> (i32, i32) {
    %c0_i32 = arith.constant 0 : i32
    %c0_i32_0 = arith.constant 0 : i32
    return %c0_i32, %arg1 : i32, i32
  }
  func.func @transform_5(%arg0: i32, %arg1: i32) -> (i32, i32) {
    %c0_i32 = arith.constant 0 : i32
    return %arg0, %arg1 : i32, i32
  }
}

</mosaic_0001>

<llo_original>
// kernel: tpu_custom_call.1
$region0: #{tpu_custom_call.1}
  #allocation0 [shape = 'u32[]', space=smem, size = 0x4, offset = 0x4, fixed_abs, tag = 'smem constant byte address 0x4 - core index']
  #allocation1 [shape = 'u32[72,128]{1,0:T(1,128)}', space=vmem, size = 0x9000, scoped, tag = 'internal scratch']
  #allocation2 [shape = 'f32[256,128]{1,0:T(8,128)}', space=vmem, size = 0x20000, scoped, tag = 'scratch operand']
  %s0 = inlined_call_operand.vmem [shape: f32[256,32], index: 0, kind: input, shape index: {}]
  %s1 = inlined_call_operand.vmem [shape: f32[32,128], index: 1, kind: input, shape index: {}]
  %s2 = inlined_call_operand.vmem [shape: f32[1,128], index: 2, kind: input, shape index: {}]
  %s3 = inlined_call_operand.vmem [shape: f32[128,128], index: 3, kind: input, shape index: {}]
  %s4 = inlined_call_operand.vmem [shape: f32[1,128], index: 4, kind: input, shape index: {}]
  %s5 = inlined_call_operand.hbm [shape: f32[256,128], index: 5, kind: output, shape index: {}]
  %s6 = sld [smem:[#allocation0]]
  $region34: #{tpu_custom_call.1} parent=0
    _
  %s8 = ssub.s32 1, %s6
  %s9 = scalar_select 0, %s8, %s6
  $region1: #{tpu_custom_call.1} parent=0
    #allocation3 [shape = 'u8[131072]{0}', space=vmem, size = 0x20000, scoped, tag = 'output window, operand 0, single buffered']
    #allocation4 [shape = 's32[1]{0}', space=sflag, size = 0x4, scoped, tag = 'scoped memory for tpu_custom_call.1']
    %10 = vsyncpa [#allocation4], 0
    // Predicated region
    $region2: #{tpu_custom_call.1} parent=1 // pred_check
      _
    $region3: #{tpu_custom_call.1} parent=1 // pred_check_branch
      %12 = sbr.rel (0) target = $region5
    $region4: #{tpu_custom_call.1} parent=1 // pred_region
      _
    $region5: #{tpu_custom_call.1} parent=1 // pred_fallthru
      _
    // Predicated region
    $region6: #{tpu_custom_call.1} parent=1 // pred_check
      _
    $region7: #{tpu_custom_call.1} parent=1 // pred_check_branch
      %14 = sbr.rel (0) target = $region9
    $region8: #{tpu_custom_call.1} parent=1 // pred_region
      _
    $region9: #{tpu_custom_call.1} parent=1 // pred_fallthru
      _
    // Predicated region
    $region10: #{tpu_custom_call.1} parent=1 // pred_check
      _
    $region11: #{tpu_custom_call.1} parent=1 // pred_check_branch
      %16 = sbr.rel (0) target = $region13
    $region12: #{tpu_custom_call.1} parent=1 // pred_region
      _
    $region13: #{tpu_custom_call.1} parent=1 // pred_fallthru
      _
    // Predicated region
    $region14: #{tpu_custom_call.1} parent=1 // pred_check
      _
    $region15: #{tpu_custom_call.1} parent=1 // pred_check_branch
      %18 = sbr.rel (0) target = $region17
    $region16: #{tpu_custom_call.1} parent=1 // pred_region
      _
    $region17: #{tpu_custom_call.1} parent=1 // pred_fallthru
      _
    // Predicated region
    $region18: #{tpu_custom_call.1} parent=1 // pred_check
      _
    $region19: #{tpu_custom_call.1} parent=1 // pred_check_branch
      %20 = sbr.rel (0) target = $region21
    $region20: #{tpu_custom_call.1} parent=1 // pred_region
      _
    $region21: #{tpu_custom_call.1} parent=1 // pred_fallthru
      _
    %p21 = scmp.eq.s32.totalorder 0, 0
    // Predicated region
    $region22: #{tpu_custom_call.1} parent=1 // pred_check
      %p22 = pneg %p21
    $region23: #{tpu_custom_call.1} parent=1 // pred_check_branch
      %24 = sbr.rel (%p22) target = $region25
    $region24: #{tpu_custom_call.1} parent=1 // pred_region
      %v25 = vld [vmem:[%s0] sm:$0xff]
      %v26 = vld [vmem:[%s0 + $0x8] sm:$0xff]
      %v27 = vld [vmem:[%s0 + $0x10] sm:$0xff]
      %v28 = vld [vmem:[%s0 + $0x18] sm:$0xff]
      %v29 = vld [vmem:[%s0 + $0x20] sm:$0xff]
      %v30 = vld [vmem:[%s0 + $0x28] sm:$0xff]
      %v31 = vld [vmem:[%s0 + $0x30] sm:$0xff]
      %v32 = vld [vmem:[%s0 + $0x38] sm:$0xff]
      %v33 = vld [vmem:[%s0 + $0x40] sm:$0xff]
      %v34 = vld [vmem:[%s0 + $0x48] sm:$0xff]
      %v35 = vld [vmem:[%s0 + $0x50] sm:$0xff]
      %v36 = vld [vmem:[%s0 + $0x58] sm:$0xff]
      %v37 = vld [vmem:[%s0 + $0x60] sm:$0xff]
      %v38 = vld [vmem:[%s0 + $0x68] sm:$0xff]
      %v39 = vld [vmem:[%s0 + $0x70] sm:$0xff]
      %v40 = vld [vmem:[%s0 + $0x78] sm:$0xff]
      %v41 = vld [vmem:[%s0 + $0x80] sm:$0xff]
      %v42 = vld [vmem:[%s0 + $0x88] sm:$0xff]
      %v43 = vld [vmem:[%s0 + $0x90] sm:$0xff]
      %v44 = vld [vmem:[%s0 + $0x98] sm:$0xff]
      %v45 = vld [vmem:[%s0 + $0xa0] sm:$0xff]
      %v46 = vld [vmem:[%s0 + $0xa8] sm:$0xff]
      %v47 = vld [vmem:[%s0 + $0xb0] sm:$0xff]
      %v48 = vld [vmem:[%s0 + $0xb8] sm:$0xff]
      %v49 = vld [vmem:[%s0 + $0xc0] sm:$0xff]
      %v50 = vld [vmem:[%s0 + $0xc8] sm:$0xff]
      %v51 = vld [vmem:[%s0 + $0xd0] sm:$0xff]
      %v52 = vld [vmem:[%s0 + $0xd8] sm:$0xff]
      %v53 = vld [vmem:[%s0 + $0xe0] sm:$0xff]
      %v54 = vld [vmem:[%s0 + $0xe8] sm:$0xff]
      %v55 = vld [vmem:[%s0 + $0xf0] sm:$0xff]
      %v56 = vld [vmem:[%s0 + $0xf8] sm:$0xff]
      %v57 = vld [vmem:[%s1] sm:$0xff]
      %v58 = vld [vmem:[%s1 + $0x8] sm:$0xff]
      %v59 = vld [vmem:[%s1 + $0x10] sm:$0xff]
      %v60 = vld [vmem:[%s1 + $0x18] sm:$0xff]
      %v61 = vld [vmem:[%s2] sm:$0x1]
      %v63 = vperm.slane %v61, 0
      %vm65 = vcmask 261120
      %v67 = vsel %vm65, %v25, 0
      %v70 = vsel %vm65, %v26, 0
      %v73 = vsel %vm65, %v27, 0
      %v76 = vsel %vm65, %v28, 0
      %v79 = vsel %vm65, %v29, 0
      %v82 = vsel %vm65, %v30, 0
      %v85 = vsel %vm65, %v31, 0
      %v88 = vsel %vm65, %v32, 0
      %v91 = vsel %vm65, %v33, 0
      %v94 = vsel %vm65, %v34, 0
      %v97 = vsel %vm65, %v35, 0
      %v100 = vsel %vm65, %v36, 0
      %v103 = vsel %vm65, %v37, 0
      %v106 = vsel %vm65, %v38, 0
      %v109 = vsel %vm65, %v39, 0
      %v112 = vsel %vm65, %v40, 0
      %v115 = vsel %vm65, %v41, 0
      %v118 = vsel %vm65, %v42, 0
      %v121 = vsel %vm65, %v43, 0
      %v124 = vsel %vm65, %v44, 0
      %v127 = vsel %vm65, %v45, 0
      %v130 = vsel %vm65, %v46, 0
      %v133 = vsel %vm65, %v47, 0
      %v136 = vsel %vm65, %v48, 0
      %v139 = vsel %vm65, %v49, 0
      %v142 = vsel %vm65, %v50, 0
      %v145 = vsel %vm65, %v51, 0
      %v148 = vsel %vm65, %v52, 0
      %v151 = vsel %vm65, %v53, 0
      %v154 = vsel %vm65, %v54, 0
      %v157 = vsel %vm65, %v55, 0
      %v160 = vsel %vm65, %v56, 0
      %162 = vmatpush.msra.mxu0 0.0
      %163 = vmatpush.msra.mxu0 0.0
      %164 = vmatpush.msra.mxu0 0.0
      %165 = vmatpush.msra.mxu0 0.0
      %166 = vmatpush.msra.mxu0 0.0
      %167 = vmatpush.msra.mxu0 0.0
      %168 = vmatpush.msra.mxu0 0.0
      %169 = vmatpush.msra.mxu0 0.0
      %170 = vmatpush.msra.mxu0 0.0
      %171 = vmatpush.msra.mxu0 0.0
      %172 = vmatpush.msra.mxu0 0.0
      %173 = vmatpush.msra.mxu0 0.0
      %174 = vmatpush.msra.mxu0 %v60
      %175 = vmatpush.msra.mxu0 %v59
      %176 = vmatpush.msra.mxu0 %v58
      %177 = vmatpush.msra.mxu0 %v57
      %178 = vmatmul.f32.gmra.mxu0 %v67
      %v179 = vpop.f32.mrf.mxu0
      %v180 = vadd.f32 %v63, %v179
      %181 = vmatmul.f32.gmra.mxu0 %v70
      %v182 = vpop.f32.mrf.mxu0
      %v183 = vadd.f32 %v63, %v182
      %184 = vmatmul.f32.gmra.mxu0 %v73
      %v185 = vpop.f32.mrf.mxu0
      %v186 = vadd.f32 %v63, %v185
      %187 = vmatmul.f32.gmra.mxu0 %v76
      %v188 = vpop.f32.mrf.mxu0
      %v189 = vadd.f32 %v63, %v188
      %190 = vmatmul.f32.gmra.mxu0 %v79
      %v191 = vpop.f32.mrf.mxu0
      %v192 = vadd.f32 %v63, %v191
      %193 = vmatmul.f32.gmra.mxu0 %v82
      %v194 = vpop.f32.mrf.mxu0
      %v195 = vadd.f32 %v63, %v194
      %196 = vmatmul.f32.gmra.mxu0 %v85
      %v197 = vpop.f32.mrf.mxu0
      %v198 = vadd.f32 %v63, %v197
      %199 = vmatmul.f32.gmra.mxu0 %v88
      %v200 = vpop.f32.mrf.mxu0
      %v201 = vadd.f32 %v63, %v200
      %202 = vmatmul.f32.gmra.mxu0 %v91
      %v203 = vpop.f32.mrf.mxu0
      %v204 = vadd.f32 %v63, %v203
      %205 = vmatmul.f32.gmra.mxu0 %v94
      %v206 = vpop.f32.mrf.mxu0
      %v207 = vadd.f32 %v63, %v206
      %208 = vmatmul.f32.gmra.mxu0 %v97
      %v209 = vpop.f32.mrf.mxu0
      %v210 = vadd.f32 %v63, %v209
      %211 = vmatmul.f32.gmra.mxu0 %v100
      %v212 = vpop.f32.mrf.mxu0
      %v213 = vadd.f32 %v63, %v212
      %214 = vmatmul.f32.gmra.mxu0 %v103
      %v215 = vpop.f32.mrf.mxu0
      %v216 = vadd.f32 %v63, %v215
      %217 = vmatmul.f32.gmra.mxu0 %v106
      %v218 = vpop.f32.mrf.mxu0
      %v219 = vadd.f32 %v63, %v218
      %220 = vmatmul.f32.gmra.mxu0 %v109
      %v221 = vpop.f32.mrf.mxu0
      %v222 = vadd.f32 %v63, %v221
      %223 = vmatmul.f32.gmra.mxu0 %v112
      %v224 = vpop.f32.mrf.mxu0
      %v225 = vadd.f32 %v63, %v224
      %226 = vmatmul.f32.gmra.mxu0 %v115
      %v227 = vpop.f32.mrf.mxu0
      %v228 = vadd.f32 %v63, %v227
      %229 = vmatmul.f32.gmra.mxu0 %v118
      %v230 = vpop.f32.mrf.mxu0
      %v231 = vadd.f32 %v63, %v230
      %232 = vmatmul.f32.gmra.mxu0 %v121
      %v233 = vpop.f32.mrf.mxu0
      %v234 = vadd.f32 %v63, %v233
      %235 = vmatmul.f32.gmra.mxu0 %v124
      %v236 = vpop.f32.mrf.mxu0
      %v237 = vadd.f32 %v63, %v236
      %238 = vmatmul.f32.gmra.mxu0 %v127
      %v239 = vpop.f32.mrf.mxu0
      %v240 = vadd.f32 %v63, %v239
      %241 = vmatmul.f32.gmra.mxu0 %v130
      %v242 = vpop.f32.mrf.mxu0
      %v243 = vadd.f32 %v63, %v242
      %244 = vmatmul.f32.gmra.mxu0 %v133
      %v245 = vpop.f32.mrf.mxu0
      %v246 = vadd.f32 %v63, %v245
      %247 = vmatmul.f32.gmra.mxu0 %v136
      %v248 = vpop.f32.mrf.mxu0
      %v249 = vadd.f32 %v63, %v248
      %250 = vmatmul.f32.gmra.mxu0 %v139
      %v251 = vpop.f32.mrf.mxu0
      %v252 = vadd.f32 %v63, %v251
      %253 = vmatmul.f32.gmra.mxu0 %v142
      %v254 = vpop.f32.mrf.mxu0
      %v255 = vadd.f32 %v63, %v254
      %256 = vmatmul.f32.gmra.mxu0 %v145
      %v257 = vpop.f32.mrf.mxu0
      %v258 = vadd.f32 %v63, %v257
      %259 = vmatmul.f32.gmra.mxu0 %v148
      %v260 = vpop.f32.mrf.mxu0
      %v261 = vadd.f32 %v63, %v260
      %262 = vmatmul.f32.gmra.mxu0 %v151
      %v263 = vpop.f32.mrf.mxu0
      %v264 = vadd.f32 %v63, %v263
      %265 = vmatmul.f32.gmra.mxu0 %v154
      %v266 = vpop.f32.mrf.mxu0
      %v267 = vadd.f32 %v63, %v266
      %268 = vmatmul.f32.gmra.mxu0 %v157
      %v269 = vpop.f32.mrf.mxu0
      %v270 = vadd.f32 %v63, %v269
      %271 = vmatmul.f32.gmra.mxu0 %v160
      %v272 = vpop.f32.mrf.mxu0
      %v273 = vadd.f32 %v63, %v272
      %274 = vdwg.mxu0
      %v275 = vsub.f32 0.0, %v180
      %v276 = vsub.f32 0.0, %v183
      %v277 = vsub.f32 0.0, %v186
      %v278 = vsub.f32 0.0, %v189
      %v279 = vsub.f32 0.0, %v192
      %v280 = vsub.f32 0.0, %v195
      %v281 = vsub.f32 0.0, %v198
      %v282 = vsub.f32 0.0, %v201
      %v283 = vsub.f32 0.0, %v204
      %v284 = vsub.f32 0.0, %v207
      %v285 = vsub.f32 0.0, %v210
      %v286 = vsub.f32 0.0, %v213
      %v287 = vsub.f32 0.0, %v216
      %v288 = vsub.f32 0.0, %v219
      %v289 = vsub.f32 0.0, %v222
      %v290 = vsub.f32 0.0, %v225
      %v291 = vsub.f32 0.0, %v228
      %v292 = vsub.f32 0.0, %v231
      %v293 = vsub.f32 0.0, %v234
      %v294 = vsub.f32 0.0, %v237
      %v295 = vsub.f32 0.0, %v240
      %v296 = vsub.f32 0.0, %v243
      %v297 = vsub.f32 0.0, %v246
      %v298 = vsub.f32 0.0, %v249
      %v299 = vsub.f32 0.0, %v252
      %v300 = vsub.f32 0.0, %v255
      %v301 = vsub.f32 0.0, %v258
      %v302 = vsub.f32 0.0, %v261
      %v303 = vsub.f32 0.0, %v264
      %v304 = vsub.f32 0.0, %v267
      %v305 = vsub.f32 0.0, %v270
      %v306 = vsub.f32 0.0, %v273
      %v307 = vmul.f32 %v275, 1.442695
      %v308 = vpow.pop %v307
      %v309 = vmul.f32 %v276, 1.442695
      %v310 = vpow.pop %v309
      %v311 = vmul.f32 %v277, 1.442695
      %v312 = vpow.pop %v311
      %v313 = vmul.f32 %v278, 1.442695
      %v314 = vpow.pop %v313
      %v315 = vmul.f32 %v279, 1.442695
      %v316 = vpow.pop %v315
      %v317 = vmul.f32 %v280, 1.442695
      %v318 = vpow.pop %v317
      %v319 = vmul.f32 %v281, 1.442695
      %v320 = vpow.pop %v319
      %v321 = vmul.f32 %v282, 1.442695
      %v322 = vpow.pop %v321
      %v323 = vmul.f32 %v283, 1.442695
      %v324 = vpow.pop %v323
      %v325 = vmul.f32 %v284, 1.442695
      %v326 = vpow.pop %v325
      %v327 = vmul.f32 %v285, 1.442695
      %v328 = vpow.pop %v327
      %v329 = vmul.f32 %v286, 1.442695
      %v330 = vpow.pop %v329
      %v331 = vmul.f32 %v287, 1.442695
      %v332 = vpow.pop %v331
      %v333 = vmul.f32 %v288, 1.442695
      %v334 = vpow.pop %v333
      %v335 = vmul.f32 %v289, 1.442695
      %v336 = vpow.pop %v335
      %v337 = vmul.f32 %v290, 1.442695
      %v338 = vpow.pop %v337
      %v339 = vmul.f32 %v291, 1.442695
      %v340 = vpow.pop %v339
      %v341 = vmul.f32 %v292, 1.442695
      %v342 = vpow.pop %v341
      %v343 = vmul.f32 %v293, 1.442695
      %v344 = vpow.pop %v343
      %v345 = vmul.f32 %v294, 1.442695
      %v346 = vpow.pop %v345
      %v347 = vmul.f32 %v295, 1.442695
      %v348 = vpow.pop %v347
      %v349 = vmul.f32 %v296, 1.442695
      %v350 = vpow.pop %v349
      %v351 = vmul.f32 %v297, 1.442695
      %v352 = vpow.pop %v351
      %v353 = vmul.f32 %v298, 1.442695
      %v354 = vpow.pop %v353
      %v355 = vmul.f32 %v299, 1.442695
      %v356 = vpow.pop %v355
      %v357 = vmul.f32 %v300, 1.442695
      %v358 = vpow.pop %v357
      %v359 = vmul.f32 %v301, 1.442695
      %v360 = vpow.pop %v359
      %v361 = vmul.f32 %v302, 1.442695
      %v362 = vpow.pop %v361
      %v363 = vmul.f32 %v303, 1.442695
      %v364 = vpow.pop %v363
      %v365 = vmul.f32 %v304, 1.442695
      %v366 = vpow.pop %v365
      %v367 = vmul.f32 %v305, 1.442695
      %v368 = vpow.pop %v367
      %v369 = vmul.f32 %v306, 1.442695
      %v370 = vpow.pop %v369
      %v371 = vadd.f32 %v308, 1.0
      %v372 = vadd.f32 %v310, 1.0
      %v373 = vadd.f32 %v312, 1.0
      %v374 = vadd.f32 %v314, 1.0
      %v375 = vadd.f32 %v316, 1.0
      %v376 = vadd.f32 %v318, 1.0
      %v377 = vadd.f32 %v320, 1.0
      %v378 = vadd.f32 %v322, 1.0
      %v379 = vadd.f32 %v324, 1.0
      %v380 = vadd.f32 %v326, 1.0
      %v381 = vadd.f32 %v328, 1.0
      %v382 = vadd.f32 %v330, 1.0
      %v383 = vadd.f32 %v332, 1.0
      %v384 = vadd.f32 %v334, 1.0
      %v385 = vadd.f32 %v336, 1.0
      %v386 = vadd.f32 %v338, 1.0
      %v387 = vadd.f32 %v340, 1.0
      %v388 = vadd.f32 %v342, 1.0
      %v389 = vadd.f32 %v344, 1.0
      %v390 = vadd.f32 %v346, 1.0
      %v391 = vadd.f32 %v348, 1.0
      %v392 = vadd.f32 %v350, 1.0
      %v393 = vadd.f32 %v352, 1.0
      %v394 = vadd.f32 %v354, 1.0
      %v395 = vadd.f32 %v356, 1.0
      %v396 = vadd.f32 %v358, 1.0
      %v397 = vadd.f32 %v360, 1.0
      %v398 = vadd.f32 %v362, 1.0
      %v399 = vadd.f32 %v364, 1.0
      %v400 = vadd.f32 %v366, 1.0
      %v401 = vadd.f32 %v368, 1.0
      %v402 = vadd.f32 %v370, 1.0
      %v403 = vrcp.pop %v371
      %v404 = vrcp.pop %v372
      %v405 = vrcp.pop %v373
      %v406 = vrcp.pop %v374
      %v407 = vrcp.pop %v375
      %v408 = vrcp.pop %v376
      %v409 = vrcp.pop %v377
      %v410 = vrcp.pop %v378
      %v411 = vrcp.pop %v379
      %v412 = vrcp.pop %v380
      %v413 = vrcp.pop %v381
      %v414 = vrcp.pop %v382
      %v415 = vrcp.pop %v383
      %v416 = vrcp.pop %v384
      %v417 = vrcp.pop %v385
      %v418 = vrcp.pop %v386
      %v419 = vrcp.pop %v387
      %v420 = vrcp.pop %v388
      %v421 = vrcp.pop %v389
      %v422 = vrcp.pop %v390
      %v423 = vrcp.pop %v391
      %v424 = vrcp.pop %v392
      %v425 = vrcp.pop %v393
      %v426 = vrcp.pop %v394
      %v427 = vrcp.pop %v395
      %v428 = vrcp.pop %v396
      %v429 = vrcp.pop %v397
      %v430 = vrcp.pop %v398
      %v431 = vrcp.pop %v399
      %v432 = vrcp.pop %v400
      %v433 = vrcp.pop %v401
      %v434 = vrcp.pop %v402
      %v435 = vmul.f32 %v180, %v403
      %v436 = vmul.f32 %v183, %v404
      %v437 = vmul.f32 %v186, %v405
      %v438 = vmul.f32 %v189, %v406
      %v439 = vmul.f32 %v192, %v407
      %v440 = vmul.f32 %v195, %v408
      %v441 = vmul.f32 %v198, %v409
      %v442 = vmul.f32 %v201, %v410
      %v443 = vmul.f32 %v204, %v411
      %v444 = vmul.f32 %v207, %v412
      %v445 = vmul.f32 %v210, %v413
      %v446 = vmul.f32 %v213, %v414
      %v447 = vmul.f32 %v216, %v415
      %v448 = vmul.f32 %v219, %v416
      %v449 = vmul.f32 %v222, %v417
      %v450 = vmul.f32 %v225, %v418
      %v451 = vmul.f32 %v228, %v419
      %v452 = vmul.f32 %v231, %v420
      %v453 = vmul.f32 %v234, %v421
      %v454 = vmul.f32 %v237, %v422
      %v455 = vmul.f32 %v240, %v423
      %v456 = vmul.f32 %v243, %v424
      %v457 = vmul.f32 %v246, %v425
      %v458 = vmul.f32 %v249, %v426
      %v459 = vmul.f32 %v252, %v427
      %v460 = vmul.f32 %v255, %v428
      %v461 = vmul.f32 %v258, %v429
      %v462 = vmul.f32 %v261, %v430
      %v463 = vmul.f32 %v264, %v431
      %v464 = vmul.f32 %v267, %v432
      %v465 = vmul.f32 %v270, %v433
      %v466 = vmul.f32 %v273, %v434
      %467 = vst [vmem:[#allocation2] sm:$0xff] %v435
      %468 = vst [vmem:[#allocation2 + $0x8] sm:$0xff] %v436
      %469 = vst [vmem:[#allocation2 + $0x10] sm:$0xff] %v437
      %470 = vst [vmem:[#allocation2 + $0x18] sm:$0xff] %v438
      %471 = vst [vmem:[#allocation2 + $0x20] sm:$0xff] %v439
      %472 = vst [vmem:[#allocation2 + $0x28] sm:$0xff] %v440
      %473 = vst [vmem:[#allocation2 + $0x30] sm:$0xff] %v441
      %474 = vst [vmem:[#allocation2 + $0x38] sm:$0xff] %v442
      %475 = vst [vmem:[#allocation2 + $0x40] sm:$0xff] %v443
      %476 = vst [vmem:[#allocation2 + $0x48] sm:$0xff] %v444
      %477 = vst [vmem:[#allocation2 + $0x50] sm:$0xff] %v445
      %478 = vst [vmem:[#allocation2 + $0x58] sm:$0xff] %v446
      %479 = vst [vmem:[#allocation2 + $0x60] sm:$0xff] %v447
      %480 = vst [vmem:[#allocation2 + $0x68] sm:$0xff] %v448
      %481 = vst [vmem:[#allocation2 + $0x70] sm:$0xff] %v449
      %482 = vst [vmem:[#allocation2 + $0x78] sm:$0xff] %v450
      %483 = vst [vmem:[#allocation2 + $0x80] sm:$0xff] %v451
      %484 = vst [vmem:[#allocation2 + $0x88] sm:$0xff] %v452
      %485 = vst [vmem:[#allocation2 + $0x90] sm:$0xff] %v453
      %486 = vst [vmem:[#allocation2 + $0x98] sm:$0xff] %v454
      %487 = vst [vmem:[#allocation2 + $0xa0] sm:$0xff] %v455
      %488 = vst [vmem:[#allocation2 + $0xa8] sm:$0xff] %v456
      %489 = vst [vmem:[#allocation2 + $0xb0] sm:$0xff] %v457
      %490 = vst [vmem:[#allocation2 + $0xb8] sm:$0xff] %v458
      %491 = vst [vmem:[#allocation2 + $0xc0] sm:$0xff] %v459
      %492 = vst [vmem:[#allocation2 + $0xc8] sm:$0xff] %v460
      %493 = vst [vmem:[#allocation2 + $0xd0] sm:$0xff] %v461
      %494 = vst [vmem:[#allocation2 + $0xd8] sm:$0xff] %v462
      %495 = vst [vmem:[#allocation2 + $0xe0] sm:$0xff] %v463
      %496 = vst [vmem:[#allocation2 + $0xe8] sm:$0xff] %v464
      %497 = vst [vmem:[#allocation2 + $0xf0] sm:$0xff] %v465
      %498 = vst [vmem:[#allocation2 + $0xf8] sm:$0xff] %v466
    $region25: #{tpu_custom_call.1} parent=1 // pred_fallthru
      _
    %v499 = vld [vmem:[#allocation2] sm:$0xff]
    %v500 = vld [vmem:[#allocation2 + $0x8] sm:$0xff]
    %v501 = vld [vmem:[#allocation2 + $0x10] sm:$0xff]
    %v502 = vld [vmem:[#allocation2 + $0x18] sm:$0xff]
    %v503 = vld [vmem:[#allocation2 + $0x20] sm:$0xff]
    %v504 = vld [vmem:[#allocation2 + $0x28] sm:$0xff]
    %v505 = vld [vmem:[#allocation2 + $0x30] sm:$0xff]
    %v506 = vld [vmem:[#allocation2 + $0x38] sm:$0xff]
    %v507 = vld [vmem:[#allocation2 + $0x40] sm:$0xff]
    %v508 = vld [vmem:[#allocation2 + $0x48] sm:$0xff]
    %v509 = vld [vmem:[#allocation2 + $0x50] sm:$0xff]
    %v510 = vld [vmem:[#allocation2 + $0x58] sm:$0xff]
    %v511 = vld [vmem:[#allocation2 + $0x60] sm:$0xff]
    %v512 = vld [vmem:[#allocation2 + $0x68] sm:$0xff]
    %v513 = vld [vmem:[#allocation2 + $0x70] sm:$0xff]
    %v514 = vld [vmem:[#allocation2 + $0x78] sm:$0xff]
    %v515 = vld [vmem:[#allocation2 + $0x80] sm:$0xff]
    %v516 = vld [vmem:[#allocation2 + $0x88] sm:$0xff]
    %v517 = vld [vmem:[#allocation2 + $0x90] sm:$0xff]
    %v518 = vld [vmem:[#allocation2 + $0x98] sm:$0xff]
    %v519 = vld [vmem:[#allocation2 + $0xa0] sm:$0xff]
    %v520 = vld [vmem:[#allocation2 + $0xa8] sm:$0xff]
    %v521 = vld [vmem:[#allocation2 + $0xb0] sm:$0xff]
    %v522 = vld [vmem:[#allocation2 + $0xb8] sm:$0xff]
    %v523 = vld [vmem:[#allocation2 + $0xc0] sm:$0xff]
    %v524 = vld [vmem:[#allocation2 + $0xc8] sm:$0xff]
    %v525 = vld [vmem:[#allocation2 + $0xd0] sm:$0xff]
    %v526 = vld [vmem:[#allocation2 + $0xd8] sm:$0xff]
    %v527 = vld [vmem:[#allocation2 + $0xe0] sm:$0xff]
    %v528 = vld [vmem:[#allocation2 + $0xe8] sm:$0xff]
    %v529 = vld [vmem:[#allocation2 + $0xf0] sm:$0xff]
    %v530 = vld [vmem:[#allocation2 + $0xf8] sm:$0xff]
    %v531 = vld [vmem:[%s3] sm:$0xff]
    %v532 = vld [vmem:[%s3 + $0x8] sm:$0xff]
    %v533 = vld [vmem:[%s3 + $0x10] sm:$0xff]
    %v534 = vld [vmem:[%s3 + $0x18] sm:$0xff]
    %v535 = vld [vmem:[%s3 + $0x20] sm:$0xff]
    %v536 = vld [vmem:[%s3 + $0x28] sm:$0xff]
    %v537 = vld [vmem:[%s3 + $0x30] sm:$0xff]
    %v538 = vld [vmem:[%s3 + $0x38] sm:$0xff]
    %v539 = vld [vmem:[%s3 + $0x40] sm:$0xff]
    %v540 = vld [vmem:[%s3 + $0x48] sm:$0xff]
    %v541 = vld [vmem:[%s3 + $0x50] sm:$0xff]
    %v542 = vld [vmem:[%s3 + $0x58] sm:$0xff]
    %v543 = vld [vmem:[%s3 + $0x60] sm:$0xff]
    %v544 = vld [vmem:[%s3 + $0x68] sm:$0xff]
    %v545 = vld [vmem:[%s3 + $0x70] sm:$0xff]
    %v546 = vld [vmem:[%s3 + $0x78] sm:$0xff]
    %v547 = vld [vmem:[%s4] sm:$0x1]
    %v549 = vperm.slane %v547, 0
    %551 = vmatpush.msra.mxu0 %v546
    %552 = vmatpush.msra.mxu0 %v545
    %553 = vmatpush.msra.mxu0 %v544
    %554 = vmatpush.msra.mxu0 %v543
    %555 = vmatpush.msra.mxu0 %v542
    %556 = vmatpush.msra.mxu0 %v541
    %557 = vmatpush.msra.mxu0 %v540
    %558 = vmatpush.msra.mxu0 %v539
    %559 = vmatpush.msra.mxu0 %v538
    %560 = vmatpush.msra.mxu0 %v537
    %561 = vmatpush.msra.mxu0 %v536
    %562 = vmatpush.msra.mxu0 %v535
    %563 = vmatpush.msra.mxu0 %v534
    %564 = vmatpush.msra.mxu0 %v533
    %565 = vmatpush.msra.mxu0 %v532
    %566 = vmatpush.msra.mxu0 %v531
    %567 = vmatmul.f32.gmra.mxu0 %v499
    %v568 = vpop.f32.mrf.mxu0
    %v569 = vadd.f32 %v549, %v568
    %570 = vmatmul.f32.gmra.mxu0 %v500
    %v571 = vpop.f32.mrf.mxu0
    %v572 = vadd.f32 %v549, %v571
    %573 = vmatmul.f32.gmra.mxu0 %v501
    %v574 = vpop.f32.mrf.mxu0
    %v575 = vadd.f32 %v549, %v574
    %576 = vmatmul.f32.gmra.mxu0 %v502
    %v577 = vpop.f32.mrf.mxu0
    %v578 = vadd.f32 %v549, %v577
    %579 = vmatmul.f32.gmra.mxu0 %v503
    %v580 = vpop.f32.mrf.mxu0
    %v581 = vadd.f32 %v549, %v580
    %582 = vmatmul.f32.gmra.mxu0 %v504
    %v583 = vpop.f32.mrf.mxu0
    %v584 = vadd.f32 %v549, %v583
    %585 = vmatmul.f32.gmra.mxu0 %v505
    %v586 = vpop.f32.mrf.mxu0
    %v587 = vadd.f32 %v549, %v586
    %588 = vmatmul.f32.gmra.mxu0 %v506
    %v589 = vpop.f32.mrf.mxu0
    %v590 = vadd.f32 %v549, %v589
    %591 = vmatmul.f32.gmra.mxu0 %v507
    %v592 = vpop.f32.mrf.mxu0
    %v593 = vadd.f32 %v549, %v592
    %594 = vmatmul.f32.gmra.mxu0 %v508
    %v595 = vpop.f32.mrf.mxu0
    %v596 = vadd.f32 %v549, %v595
    %597 = vmatmul.f32.gmra.mxu0 %v509
    %v598 = vpop.f32.mrf.mxu0
    %v599 = vadd.f32 %v549, %v598
    %600 = vmatmul.f32.gmra.mxu0 %v510
    %v601 = vpop.f32.mrf.mxu0
    %v602 = vadd.f32 %v549, %v601
    %603 = vmatmul.f32.gmra.mxu0 %v511
    %v604 = vpop.f32.mrf.mxu0
    %v605 = vadd.f32 %v549, %v604
    %606 = vmatmul.f32.gmra.mxu0 %v512
    %v607 = vpop.f32.mrf.mxu0
    %v608 = vadd.f32 %v549, %v607
    %609 = vmatmul.f32.gmra.mxu0 %v513
    %v610 = vpop.f32.mrf.mxu0
    %v611 = vadd.f32 %v549, %v610
    %612 = vmatmul.f32.gmra.mxu0 %v514
    %v613 = vpop.f32.mrf.mxu0
    %v614 = vadd.f32 %v549, %v613
    %615 = vmatmul.f32.gmra.mxu0 %v515
    %v616 = vpop.f32.mrf.mxu0
    %v617 = vadd.f32 %v549, %v616
    %618 = vmatmul.f32.gmra.mxu0 %v516
    %v619 = vpop.f32.mrf.mxu0
    %v620 = vadd.f32 %v549, %v619
    %621 = vmatmul.f32.gmra.mxu0 %v517
    %v622 = vpop.f32.mrf.mxu0
    %v623 = vadd.f32 %v549, %v622
    %624 = vmatmul.f32.gmra.mxu0 %v518
    %v625 = vpop.f32.mrf.mxu0
    %v626 = vadd.f32 %v549, %v625
    %627 = vmatmul.f32.gmra.mxu0 %v519
    %v628 = vpop.f32.mrf.mxu0
    %v629 = vadd.f32 %v549, %v628
    %630 = vmatmul.f32.gmra.mxu0 %v520
    %v631 = vpop.f32.mrf.mxu0
    %v632 = vadd.f32 %v549, %v631
    %633 = vmatmul.f32.gmra.mxu0 %v521
    %v634 = vpop.f32.mrf.mxu0
    %v635 = vadd.f32 %v549, %v634
    %636 = vmatmul.f32.gmra.mxu0 %v522
    %v637 = vpop.f32.mrf.mxu0
    %v638 = vadd.f32 %v549, %v637
    %639 = vmatmul.f32.gmra.mxu0 %v523
    %v640 = vpop.f32.mrf.mxu0
    %v641 = vadd.f32 %v549, %v640
    %642 = vmatmul.f32.gmra.mxu0 %v524
    %v643 = vpop.f32.mrf.mxu0
    %v644 = vadd.f32 %v549, %v643
    %645 = vmatmul.f32.gmra.mxu0 %v525
    %v646 = vpop.f32.mrf.mxu0
    %v647 = vadd.f32 %v549, %v646
    %648 = vmatmul.f32.gmra.mxu0 %v526
    %v649 = vpop.f32.mrf.mxu0
    %v650 = vadd.f32 %v549, %v649
    %651 = vmatmul.f32.gmra.mxu0 %v527
    %v652 = vpop.f32.mrf.mxu0
    %v653 = vadd.f32 %v549, %v652
    %654 = vmatmul.f32.gmra.mxu0 %v528
    %v655 = vpop.f32.mrf.mxu0
    %v656 = vadd.f32 %v549, %v655
    %657 = vmatmul.f32.gmra.mxu0 %v529
    %v658 = vpop.f32.mrf.mxu0
    %v659 = vadd.f32 %v549, %v658
    %660 = vmatmul.f32.gmra.mxu0 %v530
    %v661 = vpop.f32.mrf.mxu0
    %v662 = vadd.f32 %v549, %v661
    %663 = vdwg.mxu0
    %664 = vst [vmem:[#allocation3] sm:$0xff] %v569
    %665 = vst [vmem:[#allocation3 + $0x8] sm:$0xff] %v572
    %666 = vst [vmem:[#allocation3 + $0x10] sm:$0xff] %v575
    %667 = vst [vmem:[#allocation3 + $0x18] sm:$0xff] %v578
    %668 = vst [vmem:[#allocation3 + $0x20] sm:$0xff] %v581
    %669 = vst [vmem:[#allocation3 + $0x28] sm:$0xff] %v584
    %670 = vst [vmem:[#allocation3 + $0x30] sm:$0xff] %v587
    %671 = vst [vmem:[#allocation3 + $0x38] sm:$0xff] %v590
    %672 = vst [vmem:[#allocation3 + $0x40] sm:$0xff] %v593
    %673 = vst [vmem:[#allocation3 + $0x48] sm:$0xff] %v596
    %674 = vst [vmem:[#allocation3 + $0x50] sm:$0xff] %v599
    %675 = vst [vmem:[#allocation3 + $0x58] sm:$0xff] %v602
    %676 = vst [vmem:[#allocation3 + $0x60] sm:$0xff] %v605
    %677 = vst [vmem:[#allocation3 + $0x68] sm:$0xff] %v608
    %678 = vst [vmem:[#allocation3 + $0x70] sm:$0xff] %v611
    %679 = vst [vmem:[#allocation3 + $0x78] sm:$0xff] %v614
    %680 = vst [vmem:[#allocation3 + $0x80] sm:$0xff] %v617
    %681 = vst [vmem:[#allocation3 + $0x88] sm:$0xff] %v620
    %682 = vst [vmem:[#allocation3 + $0x90] sm:$0xff] %v623
    %683 = vst [vmem:[#allocation3 + $0x98] sm:$0xff] %v626
    %684 = vst [vmem:[#allocation3 + $0xa0] sm:$0xff] %v629
    %685 = vst [vmem:[#allocation3 + $0xa8] sm:$0xff] %v632
    %686 = vst [vmem:[#allocation3 + $0xb0] sm:$0xff] %v635
    %687 = vst [vmem:[#allocation3 + $0xb8] sm:$0xff] %v638
    %688 = vst [vmem:[#allocation3 + $0xc0] sm:$0xff] %v641
    %689 = vst [vmem:[#allocation3 + $0xc8] sm:$0xff] %v644
    %690 = vst [vmem:[#allocation3 + $0xd0] sm:$0xff] %v647
    %691 = vst [vmem:[#allocation3 + $0xd8] sm:$0xff] %v650
    %692 = vst [vmem:[#allocation3 + $0xe0] sm:$0xff] %v653
    %693 = vst [vmem:[#allocation3 + $0xe8] sm:$0xff] %v656
    %694 = vst [vmem:[#allocation3 + $0xf0] sm:$0xff] %v659
    %695 = vst [vmem:[#allocation3 + $0xf8] sm:$0xff] %v662
    // Predicated region
    $region26: #{tpu_custom_call.1} parent=1 // pred_check
      _
    $region27: #{tpu_custom_call.1} parent=1 // pred_check_branch
      %697 = sbr.rel (0) target = $region29
    $region28: #{tpu_custom_call.1} parent=1 // pred_region
      %699 = vsyncadd [#allocation4], 0
      %s700 = sshll.u32 [#allocation3], 4
      %s701 = int_to_ptr.vmem [resolvable:$true] %s700
      %s702 = sshll.u32 %s5, 4
      %s703 = int_to_ptr.hbm [resolvable:$true] %s702
      %708 = dma.vmem_to_hbm [thread:$0]  %s701, 4096, %s703, [#allocation4], 128, 128, 8
    $region29: #{tpu_custom_call.1} parent=1 // pred_fallthru
      _
    // Predicated region
    $region30: #{tpu_custom_call.1} parent=1 // pred_check
      _
    $region31: #{tpu_custom_call.1} parent=1 // pred_check_branch
      %710 = sbr.rel (0) target = $region33
    $region32: #{tpu_custom_call.1} parent=1 // pred_region
      %712 = dma.done [#allocation4], 4096
    $region33: #{tpu_custom_call.1} parent=1 // pred_fallthru
      _
    %713 = vsyncpa [#allocation4], 1

// kernel: tpu_custom_call.1
$region0: #{tpu_custom_call.1}
  #allocation0 [shape = 'u32[]', space=smem, size = 0x4, offset = 0x4, fixed_abs, tag = 'smem constant byte address 0x4 - core index']
  #allocation1 [shape = 'u32[72,128]{1,0:T(1,128)}', space=vmem, size = 0x9000, scoped, tag = 'internal scratch']
  #allocation2 [shape = 'f32[256,128]{1,0:T(8,128)}', space=vmem, size = 0x20000, scoped, tag = 'scratch operand']
  %s0 = inlined_call_operand.vmem [shape: f32[256,32], index: 0, kind: input, shape index: {}]
  %s1 = inlined_call_operand.vmem [shape: f32[32,128], index: 1, kind: input, shape index: {}]
  %s2 = inlined_call_operand.vmem [shape: f32[1,128], index: 2, kind: input, shape index: {}]
  %s3 = inlined_call_operand.vmem [shape: f32[128,128], index: 3, kind: input, shape index: {}]
  %s4 = inlined_call_operand.vmem [shape: f32[1,128], index: 4, kind: input, shape index: {}]
  %s5 = inlined_call_operand.hbm [shape: f32[256,128], index: 5, kind: output, shape index: {}]
  %s6 = sld [smem:[#allocation0]]
  $region34: #{tpu_custom_call.1} parent=0
    _
  %s8 = ssub.s32 1, %s6
  %s9 = scalar_select 0, %s8, %s6
  $region1: #{tpu_custom_call.1} parent=0
    #allocation3 [shape = 'u8[131072]{0}', space=vmem, size = 0x20000, scoped, tag = 'output window, operand 0, single buffered']
    #allocation4 [shape = 's32[1]{0}', space=sflag, size = 0x4, scoped, tag = 'scoped memory for tpu_custom_call.1']
    %10 = vsyncpa [#allocation4], 0
    // Predicated region
    $region2: #{tpu_custom_call.1} parent=1 // pred_check
      _
    $region3: #{tpu_custom_call.1} parent=1 // pred_check_branch
      %12 = sbr.rel (0) target = $region5
    $region4: #{tpu_custom_call.1} parent=1 // pred_region
      _
    $region5: #{tpu_custom_call.1} parent=1 // pred_fallthru
      _
    // Predicated region
    $region6: #{tpu_custom_call.1} parent=1 // pred_check
      _
    $region7: #{tpu_custom_call.1} parent=1 // pred_check_branch
      %14 = sbr.rel (0) target = $region9
    $region8: #{tpu_custom_call.1} parent=1 // pred_region
      _
    $region9: #{tpu_custom_call.1} parent=1 // pred_fallthru
      _
    // Predicated region
    $region10: #{tpu_custom_call.1} parent=1 // pred_check
      _
    $region11: #{tpu_custom_call.1} parent=1 // pred_check_branch
      %16 = sbr.rel (0) target = $region13
    $region12: #{tpu_custom_call.1} parent=1 // pred_region
      _
    $region13: #{tpu_custom_call.1} parent=1 // pred_fallthru
      _
    // Predicated region
    $region14: #{tpu_custom_call.1} parent=1 // pred_check
      _
    $region15: #{tpu_custom_call.1} parent=1 // pred_check_branch
      %18 = sbr.rel (0) target = $region17
    $region16: #{tpu_custom_call.1} parent=1 // pred_region
      _
    $region17: #{tpu_custom_call.1} parent=1 // pred_fallthru
      _
    // Predicated region
    $region18: #{tpu_custom_call.1} parent=1 // pred_check
      _
    $region19: #{tpu_custom_call.1} parent=1 // pred_check_branch
      %20 = sbr.rel (0) target = $region21
    $region20: #{tpu_custom_call.1} parent=1 // pred_region
      _
    $region21: #{tpu_custom_call.1} parent=1 // pred_fallthru
      _
    %p21 = scmp.eq.s32.totalorder 0, 0
    // Predicated region
    $region22: #{tpu_custom_call.1} parent=1 // pred_check
      %p22 = pneg %p21
    $region23: #{tpu_custom_call.1} parent=1 // pred_check_branch
      %24 = sbr.rel (%p22) target = $region25
    $region24: #{tpu_custom_call.1} parent=1 // pred_region
      %v25 = vld [vmem:[%s0] sm:$0xff]
      %v26 = vld [vmem:[%s0 + $0x8] sm:$0xff]
      %v27 = vld [vmem:[%s0 + $0x10] sm:$0xff]
      %v28 = vld [vmem:[%s0 + $0x18] sm:$0xff]
      %v29 = vld [vmem:[%s0 + $0x20] sm:$0xff]
      %v30 = vld [vmem:[%s0 + $0x28] sm:$0xff]
      %v31 = vld [vmem:[%s0 + $0x30] sm:$0xff]
      %v32 = vld [vmem:[%s0 + $0x38] sm:$0xff]
      %v33 = vld [vmem:[%s0 + $0x40] sm:$0xff]
      %v34 = vld [vmem:[%s0 + $0x48] sm:$0xff]
      %v35 = vld [vmem:[%s0 + $0x50] sm:$0xff]
      %v36 = vld [vmem:[%s0 + $0x58] sm:$0xff]
      %v37 = vld [vmem:[%s0 + $0x60] sm:$0xff]
      %v38 = vld [vmem:[%s0 + $0x68] sm:$0xff]
      %v39 = vld [vmem:[%s0 + $0x70] sm:$0xff]
      %v40 = vld [vmem:[%s0 + $0x78] sm:$0xff]
      %v41 = vld [vmem:[%s0 + $0x80] sm:$0xff]
      %v42 = vld [vmem:[%s0 + $0x88] sm:$0xff]
      %v43 = vld [vmem:[%s0 + $0x90] sm:$0xff]
      %v44 = vld [vmem:[%s0 + $0x98] sm:$0xff]
      %v45 = vld [vmem:[%s0 + $0xa0] sm:$0xff]
      %v46 = vld [vmem:[%s0 + $0xa8] sm:$0xff]
      %v47 = vld [vmem:[%s0 + $0xb0] sm:$0xff]
      %v48 = vld [vmem:[%s0 + $0xb8] sm:$0xff]
      %v49 = vld [vmem:[%s0 + $0xc0] sm:$0xff]
      %v50 = vld [vmem:[%s0 + $0xc8] sm:$0xff]
      %v51 = vld [vmem:[%s0 + $0xd0] sm:$0xff]
      %v52 = vld [vmem:[%s0 + $0xd8] sm:$0xff]
      %v53 = vld [vmem:[%s0 + $0xe0] sm:$0xff]
      %v54 = vld [vmem:[%s0 + $0xe8] sm:$0xff]
      %v55 = vld [vmem:[%s0 + $0xf0] sm:$0xff]
      %v56 = vld [vmem:[%s0 + $0xf8] sm:$0xff]
      %v57 = vld [vmem:[%s1] sm:$0xff]
      %v58 = vld [vmem:[%s1 + $0x8] sm:$0xff]
      %v59 = vld [vmem:[%s1 + $0x10] sm:$0xff]
      %v60 = vld [vmem:[%s1 + $0x18] sm:$0xff]
      %v61 = vld [vmem:[%s2] sm:$0x1]
      %v63 = vperm.slane %v61, 0
      %vm65 = vcmask 261120
      %v67 = vsel %vm65, %v25, 0
      %v70 = vsel %vm65, %v26, 0
      %v73 = vsel %vm65, %v27, 0
      %v76 = vsel %vm65, %v28, 0
      %v79 = vsel %vm65, %v29, 0
      %v82 = vsel %vm65, %v30, 0
      %v85 = vsel %vm65, %v31, 0
      %v88 = vsel %vm65, %v32, 0
      %v91 = vsel %vm65, %v33, 0
      %v94 = vsel %vm65, %v34, 0
      %v97 = vsel %vm65, %v35, 0
      %v100 = vsel %vm65, %v36, 0
      %v103 = vsel %vm65, %v37, 0
      %v106 = vsel %vm65, %v38, 0
      %v109 = vsel %vm65, %v39, 0
      %v112 = vsel %vm65, %v40, 0
      %v115 = vsel %vm65, %v41, 0
      %v118 = vsel %vm65, %v42, 0
      %v121 = vsel %vm65, %v43, 0
      %v124 = vsel %vm65, %v44, 0
      %v127 = vsel %vm65, %v45, 0
      %v130 = vsel %vm65, %v46, 0
      %v133 = vsel %vm65, %v47, 0
      %v136 = vsel %vm65, %v48, 0
      %v139 = vsel %vm65, %v49, 0
      %v142 = vsel %vm65, %v50, 0
      %v145 = vsel %vm65, %v51, 0
      %v148 = vsel %vm65, %v52, 0
      %v151 = vsel %vm65, %v53, 0
      %v154 = vsel %vm65, %v54, 0
      %v157 = vsel %vm65, %v55, 0
      %v160 = vsel %vm65, %v56, 0
      %162 = vmatpush.msra.mxu0 0.0
      %163 = vmatpush.msra.mxu0 0.0
      %164 = vmatpush.msra.mxu0 0.0
      %165 = vmatpush.msra.mxu0 0.0
      %166 = vmatpush.msra.mxu0 0.0
      %167 = vmatpush.msra.mxu0 0.0
      %168 = vmatpush.msra.mxu0 0.0
      %169 = vmatpush.msra.mxu0 0.0
      %170 = vmatpush.msra.mxu0 0.0
      %171 = vmatpush.msra.mxu0 0.0
      %172 = vmatpush.msra.mxu0 0.0
      %173 = vmatpush.msra.mxu0 0.0
      %174 = vmatpush.msra.mxu0 %v60
      %175 = vmatpush.msra.mxu0 %v59
      %176 = vmatpush.msra.mxu0 %v58
      %177 = vmatpush.msra.mxu0 %v57
      %178 = vmatmul.f32.gmra.mxu0 %v67
      %v179 = vpop.f32.mrf.mxu0
      %v180 = vadd.f32 %v63, %v179
      %181 = vmatmul.f32.gmra.mxu0 %v70
      %v182 = vpop.f32.mrf.mxu0
      %v183 = vadd.f32 %v63, %v182
      %184 = vmatmul.f32.gmra.mxu0 %v73
      %v185 = vpop.f32.mrf.mxu0
      %v186 = vadd.f32 %v63, %v185
      %187 = vmatmul.f32.gmra.mxu0 %v76
      %v188 = vpop.f32.mrf.mxu0
      %v189 = vadd.f32 %v63, %v188
      %190 = vmatmul.f32.gmra.mxu0 %v79
      %v191 = vpop.f32.mrf.mxu0
      %v192 = vadd.f32 %v63, %v191
      %193 = vmatmul.f32.gmra.mxu0 %v82
      %v194 = vpop.f32.mrf.mxu0
      %v195 = vadd.f32 %v63, %v194
      %196 = vmatmul.f32.gmra.mxu0 %v85
      %v197 = vpop.f32.mrf.mxu0
      %v198 = vadd.f32 %v63, %v197
      %199 = vmatmul.f32.gmra.mxu0 %v88
      %v200 = vpop.f32.mrf.mxu0
      %v201 = vadd.f32 %v63, %v200
      %202 = vmatmul.f32.gmra.mxu0 %v91
      %v203 = vpop.f32.mrf.mxu0
      %v204 = vadd.f32 %v63, %v203
      %205 = vmatmul.f32.gmra.mxu0 %v94
      %v206 = vpop.f32.mrf.mxu0
      %v207 = vadd.f32 %v63, %v206
      %208 = vmatmul.f32.gmra.mxu0 %v97
      %v209 = vpop.f32.mrf.mxu0
      %v210 = vadd.f32 %v63, %v209
      %211 = vmatmul.f32.gmra.mxu0 %v100
      %v212 = vpop.f32.mrf.mxu0
      %v213 = vadd.f32 %v63, %v212
      %214 = vmatmul.f32.gmra.mxu0 %v103
      %v215 = vpop.f32.mrf.mxu0
      %v216 = vadd.f32 %v63, %v215
      %217 = vmatmul.f32.gmra.mxu0 %v106
      %v218 = vpop.f32.mrf.mxu0
      %v219 = vadd.f32 %v63, %v218
      %220 = vmatmul.f32.gmra.mxu0 %v109
      %v221 = vpop.f32.mrf.mxu0
      %v222 = vadd.f32 %v63, %v221
      %223 = vmatmul.f32.gmra.mxu0 %v112
      %v224 = vpop.f32.mrf.mxu0
      %v225 = vadd.f32 %v63, %v224
      %226 = vmatmul.f32.gmra.mxu0 %v115
      %v227 = vpop.f32.mrf.mxu0
      %v228 = vadd.f32 %v63, %v227
      %229 = vmatmul.f32.gmra.mxu0 %v118
      %v230 = vpop.f32.mrf.mxu0
      %v231 = vadd.f32 %v63, %v230
      %232 = vmatmul.f32.gmra.mxu0 %v121
      %v233 = vpop.f32.mrf.mxu0
      %v234 = vadd.f32 %v63, %v233
      %235 = vmatmul.f32.gmra.mxu0 %v124
      %v236 = vpop.f32.mrf.mxu0
      %v237 = vadd.f32 %v63, %v236
      %238 = vmatmul.f32.gmra.mxu0 %v127
      %v239 = vpop.f32.mrf.mxu0
      %v240 = vadd.f32 %v63, %v239
      %241 = vmatmul.f32.gmra.mxu0 %v130
      %v242 = vpop.f32.mrf.mxu0
      %v243 = vadd.f32 %v63, %v242
      %244 = vmatmul.f32.gmra.mxu0 %v133
      %v245 = vpop.f32.mrf.mxu0
      %v246 = vadd.f32 %v63, %v245
      %247 = vmatmul.f32.gmra.mxu0 %v136
      %v248 = vpop.f32.mrf.mxu0
      %v249 = vadd.f32 %v63, %v248
      %250 = vmatmul.f32.gmra.mxu0 %v139
      %v251 = vpop.f32.mrf.mxu0
      %v252 = vadd.f32 %v63, %v251
      %253 = vmatmul.f32.gmra.mxu0 %v142
      %v254 = vpop.f32.mrf.mxu0
      %v255 = vadd.f32 %v63, %v254
      %256 = vmatmul.f32.gmra.mxu0 %v145
      %v257 = vpop.f32.mrf.mxu0
      %v258 = vadd.f32 %v63, %v257
      %259 = vmatmul.f32.gmra.mxu0 %v148
      %v260 = vpop.f32.mrf.mxu0
      %v261 = vadd.f32 %v63, %v260
      %262 = vmatmul.f32.gmra.mxu0 %v151
      %v263 = vpop.f32.mrf.mxu0
      %v264 = vadd.f32 %v63, %v263
      %265 = vmatmul.f32.gmra.mxu0 %v154
      %v266 = vpop.f32.mrf.mxu0
      %v267 = vadd.f32 %v63, %v266
      %268 = vmatmul.f32.gmra.mxu0 %v157
      %v269 = vpop.f32.mrf.mxu0
      %v270 = vadd.f32 %v63, %v269
      %271 = vmatmul.f32.gmra.mxu0 %v160
      %v272 = vpop.f32.mrf.mxu0
      %v273 = vadd.f32 %v63, %v272
      %274 = vdwg.mxu0
      %v275 = vsub.f32 0.0, %v180
      %v276 = vsub.f32 0.0, %v183
      %v277 = vsub.f32 0.0, %v186
      %v278 = vsub.f32 0.0, %v189
      %v279 = vsub.f32 0.0, %v192
      %v280 = vsub.f32 0.0, %v195
      %v281 = vsub.f32 0.0, %v198
      %v282 = vsub.f32 0.0, %v201
      %v283 = vsub.f32 0.0, %v204
      %v284 = vsub.f32 0.0, %v207
      %v285 = vsub.f32 0.0, %v210
      %v286 = vsub.f32 0.0, %v213
      %v287 = vsub.f32 0.0, %v216
      %v288 = vsub.f32 0.0, %v219
      %v289 = vsub.f32 0.0, %v222
      %v290 = vsub.f32 0.0, %v225
      %v291 = vsub.f32 0.0, %v228
      %v292 = vsub.f32 0.0, %v231
      %v293 = vsub.f32 0.0, %v234
      %v294 = vsub.f32 0.0, %v237
      %v295 = vsub.f32 0.0, %v240
      %v296 = vsub.f32 0.0, %v243
      %v297 = vsub.f32 0.0, %v246
      %v298 = vsub.f32 0.0, %v249
      %v299 = vsub.f32 0.0, %v252
      %v300 = vsub.f32 0.0, %v255
      %v301 = vsub.f32 0.0, %v258
      %v302 = vsub.f32 0.0, %v261
      %v303 = vsub.f32 0.0, %v264
      %v304 = vsub.f32 0.0, %v267
      %v305 = vsub.f32 0.0, %v270
      %v306 = vsub.f32 0.0, %v273
      %v307 = vmul.f32 %v275, 1.442695
      %v308 = vpow.pop %v307
      %v309 = vmul.f32 %v276, 1.442695
      %v310 = vpow.pop %v309
      %v311 = vmul.f32 %v277, 1.442695
      %v312 = vpow.pop %v311
      %v313 = vmul.f32 %v278, 1.442695
      %v314 = vpow.pop %v313
      %v315 = vmul.f32 %v279, 1.442695
      %v316 = vpow.pop %v315
      %v317 = vmul.f32 %v280, 1.442695
      %v318 = vpow.pop %v317
      %v319 = vmul.f32 %v281, 1.442695
      %v320 = vpow.pop %v319
      %v321 = vmul.f32 %v282, 1.442695
      %v322 = vpow.pop %v321
      %v323 = vmul.f32 %v283, 1.442695
      %v324 = vpow.pop %v323
      %v325 = vmul.f32 %v284, 1.442695
      %v326 = vpow.pop %v325
      %v327 = vmul.f32 %v285, 1.442695
      %v328 = vpow.pop %v327
      %v329 = vmul.f32 %v286, 1.442695
      %v330 = vpow.pop %v329
      %v331 = vmul.f32 %v287, 1.442695
      %v332 = vpow.pop %v331
      %v333 = vmul.f32 %v288, 1.442695
      %v334 = vpow.pop %v333
      %v335 = vmul.f32 %v289, 1.442695
      %v336 = vpow.pop %v335
      %v337 = vmul.f32 %v290, 1.442695
      %v338 = vpow.pop %v337
      %v339 = vmul.f32 %v291, 1.442695
      %v340 = vpow.pop %v339
      %v341 = vmul.f32 %v292, 1.442695
      %v342 = vpow.pop %v341
      %v343 = vmul.f32 %v293, 1.442695
      %v344 = vpow.pop %v343
      %v345 = vmul.f32 %v294, 1.442695
      %v346 = vpow.pop %v345
      %v347 = vmul.f32 %v295, 1.442695
      %v348 = vpow.pop %v347
      %v349 = vmul.f32 %v296, 1.442695
      %v350 = vpow.pop %v349
      %v351 = vmul.f32 %v297, 1.442695
      %v352 = vpow.pop %v351
      %v353 = vmul.f32 %v298, 1.442695
      %v354 = vpow.pop %v353
      %v355 = vmul.f32 %v299, 1.442695
      %v356 = vpow.pop %v355
      %v357 = vmul.f32 %v300, 1.442695
      %v358 = vpow.pop %v357
      %v359 = vmul.f32 %v301, 1.442695
      %v360 = vpow.pop %v359
      %v361 = vmul.f32 %v302, 1.442695
      %v362 = vpow.pop %v361
      %v363 = vmul.f32 %v303, 1.442695
      %v364 = vpow.pop %v363
      %v365 = vmul.f32 %v304, 1.442695
      %v366 = vpow.pop %v365
      %v367 = vmul.f32 %v305, 1.442695
      %v368 = vpow.pop %v367
      %v369 = vmul.f32 %v306, 1.442695
      %v370 = vpow.pop %v369
      %v371 = vadd.f32 %v308, 1.0
      %v372 = vadd.f32 %v310, 1.0
      %v373 = vadd.f32 %v312, 1.0
      %v374 = vadd.f32 %v314, 1.0
      %v375 = vadd.f32 %v316, 1.0
      %v376 = vadd.f32 %v318, 1.0
      %v377 = vadd.f32 %v320, 1.0
      %v378 = vadd.f32 %v322, 1.0
      %v379 = vadd.f32 %v324, 1.0
      %v380 = vadd.f32 %v326, 1.0
      %v381 = vadd.f32 %v328, 1.0
      %v382 = vadd.f32 %v330, 1.0
      %v383 = vadd.f32 %v332, 1.0
      %v384 = vadd.f32 %v334, 1.0
      %v385 = vadd.f32 %v336, 1.0
      %v386 = vadd.f32 %v338, 1.0
      %v387 = vadd.f32 %v340, 1.0
      %v388 = vadd.f32 %v342, 1.0
      %v389 = vadd.f32 %v344, 1.0
      %v390 = vadd.f32 %v346, 1.0
      %v391 = vadd.f32 %v348, 1.0
      %v392 = vadd.f32 %v350, 1.0
      %v393 = vadd.f32 %v352, 1.0
      %v394 = vadd.f32 %v354, 1.0
      %v395 = vadd.f32 %v356, 1.0
      %v396 = vadd.f32 %v358, 1.0
      %v397 = vadd.f32 %v360, 1.0
      %v398 = vadd.f32 %v362, 1.0
      %v399 = vadd.f32 %v364, 1.0
      %v400 = vadd.f32 %v366, 1.0
      %v401 = vadd.f32 %v368, 1.0
      %v402 = vadd.f32 %v370, 1.0
      %v403 = vrcp.pop %v371
      %v404 = vrcp.pop %v372
      %v405 = vrcp.pop %v373
      %v406 = vrcp.pop %v374
      %v407 = vrcp.pop %v375
      %v408 = vrcp.pop %v376
      %v409 = vrcp.pop %v377
      %v410 = vrcp.pop %v378
      %v411 = vrcp.pop %v379
      %v412 = vrcp.pop %v380
      %v413 = vrcp.pop %v381
      %v414 = vrcp.pop %v382
      %v415 = vrcp.pop %v383
      %v416 = vrcp.pop %v384
      %v417 = vrcp.pop %v385
      %v418 = vrcp.pop %v386
      %v419 = vrcp.pop %v387
      %v420 = vrcp.pop %v388
      %v421 = vrcp.pop %v389
      %v422 = vrcp.pop %v390
      %v423 = vrcp.pop %v391
      %v424 = vrcp.pop %v392
      %v425 = vrcp.pop %v393
      %v426 = vrcp.pop %v394
      %v427 = vrcp.pop %v395
      %v428 = vrcp.pop %v396
      %v429 = vrcp.pop %v397
      %v430 = vrcp.pop %v398
      %v431 = vrcp.pop %v399
      %v432 = vrcp.pop %v400
      %v433 = vrcp.pop %v401
      %v434 = vrcp.pop %v402
      %v435 = vmul.f32 %v180, %v403
      %v436 = vmul.f32 %v183, %v404
      %v437 = vmul.f32 %v186, %v405
      %v438 = vmul.f32 %v189, %v406
      %v439 = vmul.f32 %v192, %v407
      %v440 = vmul.f32 %v195, %v408
      %v441 = vmul.f32 %v198, %v409
      %v442 = vmul.f32 %v201, %v410
      %v443 = vmul.f32 %v204, %v411
      %v444 = vmul.f32 %v207, %v412
      %v445 = vmul.f32 %v210, %v413
      %v446 = vmul.f32 %v213, %v414
      %v447 = vmul.f32 %v216, %v415
      %v448 = vmul.f32 %v219, %v416
      %v449 = vmul.f32 %v222, %v417
      %v450 = vmul.f32 %v225, %v418
      %v451 = vmul.f32 %v228, %v419
      %v452 = vmul.f32 %v231, %v420
      %v453 = vmul.f32 %v234, %v421
      %v454 = vmul.f32 %v237, %v422
      %v455 = vmul.f32 %v240, %v423
      %v456 = vmul.f32 %v243, %v424
      %v457 = vmul.f32 %v246, %v425
      %v458 = vmul.f32 %v249, %v426
      %v459 = vmul.f32 %v252, %v427
      %v460 = vmul.f32 %v255, %v428
      %v461 = vmul.f32 %v258, %v429
      %v462 = vmul.f32 %v261, %v430
      %v463 = vmul.f32 %v264, %v431
      %v464 = vmul.f32 %v267, %v432
      %v465 = vmul.f32 %v270, %v433
      %v466 = vmul.f32 %v273, %v434
      %467 = vst [vmem:[#allocation2] sm:$0xff] %v435
      %468 = vst [vmem:[#allocation2 + $0x8] sm:$0xff] %v436
      %469 = vst [vmem:[#allocation2 + $0x10] sm:$0xff] %v437
      %470 = vst [vmem:[#allocation2 + $0x18] sm:$0xff] %v438
      %471 = vst [vmem:[#allocation2 + $0x20] sm:$0xff] %v439
      %472 = vst [vmem:[#allocation2 + $0x28] sm:$0xff] %v440
      %473 = vst [vmem:[#allocation2 + $0x30] sm:$0xff] %v441
      %474 = vst [vmem:[#allocation2 + $0x38] sm:$0xff] %v442
      %475 = vst [vmem:[#allocation2 + $0x40] sm:$0xff] %v443
      %476 = vst [vmem:[#allocation2 + $0x48] sm:$0xff] %v444
      %477 = vst [vmem:[#allocation2 + $0x50] sm:$0xff] %v445
      %478 = vst [vmem:[#allocation2 + $0x58] sm:$0xff] %v446
      %479 = vst [vmem:[#allocation2 + $0x60] sm:$0xff] %v447
      %480 = vst [vmem:[#allocation2 + $0x68] sm:$0xff] %v448
      %481 = vst [vmem:[#allocation2 + $0x70] sm:$0xff] %v449
      %482 = vst [vmem:[#allocation2 + $0x78] sm:$0xff] %v450
      %483 = vst [vmem:[#allocation2 + $0x80] sm:$0xff] %v451
      %484 = vst [vmem:[#allocation2 + $0x88] sm:$0xff] %v452
      %485 = vst [vmem:[#allocation2 + $0x90] sm:$0xff] %v453
      %486 = vst [vmem:[#allocation2 + $0x98] sm:$0xff] %v454
      %487 = vst [vmem:[#allocation2 + $0xa0] sm:$0xff] %v455
      %488 = vst [vmem:[#allocation2 + $0xa8] sm:$0xff] %v456
      %489 = vst [vmem:[#allocation2 + $0xb0] sm:$0xff] %v457
      %490 = vst [vmem:[#allocation2 + $0xb8] sm:$0xff] %v458
      %491 = vst [vmem:[#allocation2 + $0xc0] sm:$0xff] %v459
      %492 = vst [vmem:[#allocation2 + $0xc8] sm:$0xff] %v460
      %493 = vst [vmem:[#allocation2 + $0xd0] sm:$0xff] %v461
      %494 = vst [vmem:[#allocation2 + $0xd8] sm:$0xff] %v462
      %495 = vst [vmem:[#allocation2 + $0xe0] sm:$0xff] %v463
      %496 = vst [vmem:[#allocation2 + $0xe8] sm:$0xff] %v464
      %497 = vst [vmem:[#allocation2 + $0xf0] sm:$0xff] %v465
      %498 = vst [vmem:[#allocation2 + $0xf8] sm:$0xff] %v466
    $region25: #{tpu_custom_call.1} parent=1 // pred_fallthru
      _
    %v499 = vld [vmem:[#allocation2] sm:$0xff]
    %v500 = vld [vmem:[#allocation2 + $0x8] sm:$0xff]
    %v501 = vld [vmem:[#allocation2 + $0x10] sm:$0xff]
    %v502 = vld [vmem:[#allocation2 + $0x18] sm:$0xff]
    %v503 = vld [vmem:[#allocation2 + $0x20] sm:$0xff]
    %v504 = vld [vmem:[#allocation2 + $0x28] sm:$0xff]
    %v505 = vld [vmem:[#allocation2 + $0x30] sm:$0xff]
    %v506 = vld [vmem:[#allocation2 + $0x38] sm:$0xff]
    %v507 = vld [vmem:[#allocation2 + $0x40] sm:$0xff]
    %v508 = vld [vmem:[#allocation2 + $0x48] sm:$0xff]
    %v509 = vld [vmem:[#allocation2 + $0x50] sm:$0xff]
    %v510 = vld [vmem:[#allocation2 + $0x58] sm:$0xff]
    %v511 = vld [vmem:[#allocation2 + $0x60] sm:$0xff]
    %v512 = vld [vmem:[#allocation2 + $0x68] sm:$0xff]
    %v513 = vld [vmem:[#allocation2 + $0x70] sm:$0xff]
    %v514 = vld [vmem:[#allocation2 + $0x78] sm:$0xff]
    %v515 = vld [vmem:[#allocation2 + $0x80] sm:$0xff]
    %v516 = vld [vmem:[#allocation2 + $0x88] sm:$0xff]
    %v517 = vld [vmem:[#allocation2 + $0x90] sm:$0xff]
    %v518 = vld [vmem:[#allocation2 + $0x98] sm:$0xff]
    %v519 = vld [vmem:[#allocation2 + $0xa0] sm:$0xff]
    %v520 = vld [vmem:[#allocation2 + $0xa8] sm:$0xff]
    %v521 = vld [vmem:[#allocation2 + $0xb0] sm:$0xff]
    %v522 = vld [vmem:[#allocation2 + $0xb8] sm:$0xff]
    %v523 = vld [vmem:[#allocation2 + $0xc0] sm:$0xff]
    %v524 = vld [vmem:[#allocation2 + $0xc8] sm:$0xff]
    %v525 = vld [vmem:[#allocation2 + $0xd0] sm:$0xff]
    %v526 = vld [vmem:[#allocation2 + $0xd8] sm:$0xff]
    %v527 = vld [vmem:[#allocation2 + $0xe0] sm:$0xff]
    %v528 = vld [vmem:[#allocation2 + $0xe8] sm:$0xff]
    %v529 = vld [vmem:[#allocation2 + $0xf0] sm:$0xff]
    %v530 = vld [vmem:[#allocation2 + $0xf8] sm:$0xff]
    %v531 = vld [vmem:[%s3] sm:$0xff]
    %v532 = vld [vmem:[%s3 + $0x8] sm:$0xff]
    %v533 = vld [vmem:[%s3 + $0x10] sm:$0xff]
    %v534 = vld [vmem:[%s3 + $0x18] sm:$0xff]
    %v535 = vld [vmem:[%s3 + $0x20] sm:$0xff]
    %v536 = vld [vmem:[%s3 + $0x28] sm:$0xff]
    %v537 = vld [vmem:[%s3 + $0x30] sm:$0xff]
    %v538 = vld [vmem:[%s3 + $0x38] sm:$0xff]
    %v539 = vld [vmem:[%s3 + $0x40] sm:$0xff]
    %v540 = vld [vmem:[%s3 + $0x48] sm:$0xff]
    %v541 = vld [vmem:[%s3 + $0x50] sm:$0xff]
    %v542 = vld [vmem:[%s3 + $0x58] sm:$0xff]
    %v543 = vld [vmem:[%s3 + $0x60] sm:$0xff]
    %v544 = vld [vmem:[%s3 + $0x68] sm:$0xff]
    %v545 = vld [vmem:[%s3 + $0x70] sm:$0xff]
    %v546 = vld [vmem:[%s3 + $0x78] sm:$0xff]
    %v547 = vld [vmem:[%s4] sm:$0x1]
    %v549 = vperm.slane %v547, 0
    %551 = vmatpush.msra.mxu0 %v546
    %552 = vmatpush.msra.mxu0 %v545
    %553 = vmatpush.msra.mxu0 %v544
    %554 = vmatpush.msra.mxu0 %v543
    %555 = vmatpush.msra.mxu0 %v542
    %556 = vmatpush.msra.mxu0 %v541
    %557 = vmatpush.msra.mxu0 %v540
    %558 = vmatpush.msra.mxu0 %v539
    %559 = vmatpush.msra.mxu0 %v538
    %560 = vmatpush.msra.mxu0 %v537
    %561 = vmatpush.msra.mxu0 %v536
    %562 = vmatpush.msra.mxu0 %v535
    %563 = vmatpush.msra.mxu0 %v534
    %564 = vmatpush.msra.mxu0 %v533
    %565 = vmatpush.msra.mxu0 %v532
    %566 = vmatpush.msra.mxu0 %v531
    %567 = vmatmul.f32.gmra.mxu0 %v499
    %v568 = vpop.f32.mrf.mxu0
    %v569 = vadd.f32 %v549, %v568
    %570 = vmatmul.f32.gmra.mxu0 %v500
    %v571 = vpop.f32.mrf.mxu0
    %v572 = vadd.f32 %v549, %v571
    %573 = vmatmul.f32.gmra.mxu0 %v501
    %v574 = vpop.f32.mrf.mxu0
    %v575 = vadd.f32 %v549, %v574
    %576 = vmatmul.f32.gmra.mxu0 %v502
    %v577 = vpop.f32.mrf.mxu0
    %v578 = vadd.f32 %v549, %v577
    %579 = vmatmul.f32.gmra.mxu0 %v503
    %v580 = vpop.f32.mrf.mxu0
    %v581 = vadd.f32 %v549, %v580
    %582 = vmatmul.f32.gmra.mxu0 %v504
    %v583 = vpop.f32.mrf.mxu0
    %v584 = vadd.f32 %v549, %v583
    %585 = vmatmul.f32.gmra.mxu0 %v505
    %v586 = vpop.f32.mrf.mxu0
    %v587 = vadd.f32 %v549, %v586
    %588 = vmatmul.f32.gmra.mxu0 %v506
    %v589 = vpop.f32.mrf.mxu0
    %v590 = vadd.f32 %v549, %v589
    %591 = vmatmul.f32.gmra.mxu0 %v507
    %v592 = vpop.f32.mrf.mxu0
    %v593 = vadd.f32 %v549, %v592
    %594 = vmatmul.f32.gmra.mxu0 %v508
    %v595 = vpop.f32.mrf.mxu0
    %v596 = vadd.f32 %v549, %v595
    %597 = vmatmul.f32.gmra.mxu0 %v509
    %v598 = vpop.f32.mrf.mxu0
    %v599 = vadd.f32 %v549, %v598
    %600 = vmatmul.f32.gmra.mxu0 %v510
    %v601 = vpop.f32.mrf.mxu0
    %v602 = vadd.f32 %v549, %v601
    %603 = vmatmul.f32.gmra.mxu0 %v511
    %v604 = vpop.f32.mrf.mxu0
    %v605 = vadd.f32 %v549, %v604
    %606 = vmatmul.f32.gmra.mxu0 %v512
    %v607 = vpop.f32.mrf.mxu0
    %v608 = vadd.f32 %v549, %v607
    %609 = vmatmul.f32.gmra.mxu0 %v513
    %v610 = vpop.f32.mrf.mxu0
    %v611 = vadd.f32 %v549, %v610
    %612 = vmatmul.f32.gmra.mxu0 %v514
    %v613 = vpop.f32.mrf.mxu0
    %v614 = vadd.f32 %v549, %v613
    %615 = vmatmul.f32.gmra.mxu0 %v515
    %v616 = vpop.f32.mrf.mxu0
    %v617 = vadd.f32 %v549, %v616
    %618 = vmatmul.f32.gmra.mxu0 %v516
    %v619 = vpop.f32.mrf.mxu0
    %v620 = vadd.f32 %v549, %v619
    %621 = vmatmul.f32.gmra.mxu0 %v517
    %v622 = vpop.f32.mrf.mxu0
    %v623 = vadd.f32 %v549, %v622
    %624 = vmatmul.f32.gmra.mxu0 %v518
    %v625 = vpop.f32.mrf.mxu0
    %v626 = vadd.f32 %v549, %v625
    %627 = vmatmul.f32.gmra.mxu0 %v519
    %v628 = vpop.f32.mrf.mxu0
    %v629 = vadd.f32 %v549, %v628
    %630 = vmatmul.f32.gmra.mxu0 %v520
    %v631 = vpop.f32.mrf.mxu0
    %v632 = vadd.f32 %v549, %v631
    %633 = vmatmul.f32.gmra.mxu0 %v521
    %v634 = vpop.f32.mrf.mxu0
    %v635 = vadd.f32 %v549, %v634
    %636 = vmatmul.f32.gmra.mxu0 %v522
    %v637 = vpop.f32.mrf.mxu0
    %v638 = vadd.f32 %v549, %v637
    %639 = vmatmul.f32.gmra.mxu0 %v523
    %v640 = vpop.f32.mrf.mxu0
    %v641 = vadd.f32 %v549, %v640
    %642 = vmatmul.f32.gmra.mxu0 %v524
    %v643 = vpop.f32.mrf.mxu0
    %v644 = vadd.f32 %v549, %v643
    %645 = vmatmul.f32.gmra.mxu0 %v525
    %v646 = vpop.f32.mrf.mxu0
    %v647 = vadd.f32 %v549, %v646
    %648 = vmatmul.f32.gmra.mxu0 %v526
    %v649 = vpop.f32.mrf.mxu0
    %v650 = vadd.f32 %v549, %v649
    %651 = vmatmul.f32.gmra.mxu0 %v527
    %v652 = vpop.f32.mrf.mxu0
    %v653 = vadd.f32 %v549, %v652
    %654 = vmatmul.f32.gmra.mxu0 %v528
    %v655 = vpop.f32.mrf.mxu0
    %v656 = vadd.f32 %v549, %v655
    %657 = vmatmul.f32.gmra.mxu0 %v529
    %v658 = vpop.f32.mrf.mxu0
    %v659 = vadd.f32 %v549, %v658
    %660 = vmatmul.f32.gmra.mxu0 %v530
    %v661 = vpop.f32.mrf.mxu0
    %v662 = vadd.f32 %v549, %v661
    %663 = vdwg.mxu0
    %664 = vst [vmem:[#allocation3] sm:$0xff] %v569
    %665 = vst [vmem:[#allocation3 + $0x8] sm:$0xff] %v572
    %666 = vst [vmem:[#allocation3 + $0x10] sm:$0xff] %v575
    %667 = vst [vmem:[#allocation3 + $0x18] sm:$0xff] %v578
    %668 = vst [vmem:[#allocation3 + $0x20] sm:$0xff] %v581
    %669 = vst [vmem:[#allocation3 + $0x28] sm:$0xff] %v584
    %670 = vst [vmem:[#allocation3 + $0x30] sm:$0xff] %v587
    %671 = vst [vmem:[#allocation3 + $0x38] sm:$0xff] %v590
    %672 = vst [vmem:[#allocation3 + $0x40] sm:$0xff] %v593
    %673 = vst [vmem:[#allocation3 + $0x48] sm:$0xff] %v596
    %674 = vst [vmem:[#allocation3 + $0x50] sm:$0xff] %v599
    %675 = vst [vmem:[#allocation3 + $0x58] sm:$0xff] %v602
    %676 = vst [vmem:[#allocation3 + $0x60] sm:$0xff] %v605
    %677 = vst [vmem:[#allocation3 + $0x68] sm:$0xff] %v608
    %678 = vst [vmem:[#allocation3 + $0x70] sm:$0xff] %v611
    %679 = vst [vmem:[#allocation3 + $0x78] sm:$0xff] %v614
    %680 = vst [vmem:[#allocation3 + $0x80] sm:$0xff] %v617
    %681 = vst [vmem:[#allocation3 + $0x88] sm:$0xff] %v620
    %682 = vst [vmem:[#allocation3 + $0x90] sm:$0xff] %v623
    %683 = vst [vmem:[#allocation3 + $0x98] sm:$0xff] %v626
    %684 = vst [vmem:[#allocation3 + $0xa0] sm:$0xff] %v629
    %685 = vst [vmem:[#allocation3 + $0xa8] sm:$0xff] %v632
    %686 = vst [vmem:[#allocation3 + $0xb0] sm:$0xff] %v635
    %687 = vst [vmem:[#allocation3 + $0xb8] sm:$0xff] %v638
    %688 = vst [vmem:[#allocation3 + $0xc0] sm:$0xff] %v641
    %689 = vst [vmem:[#allocation3 + $0xc8] sm:$0xff] %v644
    %690 = vst [vmem:[#allocation3 + $0xd0] sm:$0xff] %v647
    %691 = vst [vmem:[#allocation3 + $0xd8] sm:$0xff] %v650
    %692 = vst [vmem:[#allocation3 + $0xe0] sm:$0xff] %v653
    %693 = vst [vmem:[#allocation3 + $0xe8] sm:$0xff] %v656
    %694 = vst [vmem:[#allocation3 + $0xf0] sm:$0xff] %v659
    %695 = vst [vmem:[#allocation3 + $0xf8] sm:$0xff] %v662
    // Predicated region
    $region26: #{tpu_custom_call.1} parent=1 // pred_check
      _
    $region27: #{tpu_custom_call.1} parent=1 // pred_check_branch
      %697 = sbr.rel (0) target = $region29
    $region28: #{tpu_custom_call.1} parent=1 // pred_region
      %699 = vsyncadd [#allocation4], 0
      %s700 = sshll.u32 [#allocation3], 4
      %s701 = int_to_ptr.vmem [resolvable:$true] %s700
      %s702 = sshll.u32 %s5, 4
      %s703 = int_to_ptr.hbm [resolvable:$true] %s702
      %708 = dma.vmem_to_hbm [thread:$0]  %s701, 4096, %s703, [#allocation4], 128, 128, 8
    $region29: #{tpu_custom_call.1} parent=1 // pred_fallthru
      _
    // Predicated region
    $region30: #{tpu_custom_call.1} parent=1 // pred_check
      _
    $region31: #{tpu_custom_call.1} parent=1 // pred_check_branch
      %710 = sbr.rel (0) target = $region33
    $region32: #{tpu_custom_call.1} parent=1 // pred_region
      %712 = dma.done [#allocation4], 4096
    $region33: #{tpu_custom_call.1} parent=1 // pred_fallthru
      _
    %713 = vsyncpa [#allocation4], 1

</llo_original>
